<compile_context>
chip_gen: v6e
topology: v6e:2x2x1
jax: 0.10.0
libtpu: 0.0.40
codegen_flags: <defaults>
</compile_context>

<pallas_src>
import jax
import jax.numpy as jnp
import numpy as np
from jax.experimental import pallas as pl
from jax.experimental.pallas import tpu as pltpu

BN_EPS = 1e-5
# jnp.bfloat16 on v5e/v6e/v7x for the native MXU rate (looser tolerance);
# jnp.float32 keeps the strict 5e-4 check below bit-tight.
MXU_INPUT_DTYPE = jnp.float32


def _resblock_kernel(x_ref, gamma_ref, beta_ref,
                     wb1_ref, b1_ref, pw_ref, wb2_ref, b2_ref,
                     out_ref, pad_ref):
    # x_ref   : (N, H, W*C)        f32, (W, C) packed on the lane axis
    # pad_ref : (N, H+2, (W+2)*C)  f32 scratch; zero 1-px border reused by both convs
    # wb*_ref : (3, (W+2)*C, W*C)  banded conv weights (one slab per kh)
    # b*_ref, pw_ref : (1, W*C)    bias / PReLU slope, pre-tiled over W
    # gamma/beta     : (1, C)
    N, Hp, Lp = pad_ref.shape
    C = gamma_ref.shape[-1]
    H, W = Hp - 2, Lp // C - 2
    NH, WC = N * H, W * C

    def sum_w(v):          # (1, W*C) -> (1, C): sum the W channel groups (lane windows)
        acc = v[:, 0:C]
        for w in range(1, W):
            acc = acc + v[:, w * C:(w + 1) * C]
        return acc

    def tile_w(v):         # (1, C) -> (1, W*C), w-major / c-minor lane order
        return jnp.concatenate([v] * W, axis=-1)

    # ---- BatchNorm2d, training-mode batch stats (mean first, centred var) ---
    x2 = x_ref[...].reshape(NH, WC)
    inv_m = jnp.float32(1.0 / (N * H * W))
    mean_c = sum_w(jnp.sum(x2, axis=0, keepdims=True)) * inv_m        # (1, C)
    xc = x2 - tile_w(mean_c)
    var_c = sum_w(jnp.sum(xc * xc, axis=0, keepdims=True)) * inv_m    # biased var
    bn_scale = gamma_ref[...] * jax.lax.rsqrt(var_c + BN_EPS)         # (1, C)
    bn_shift = beta_ref[...] - mean_c * bn_scale                      # (1, C)
    xbn = x2 * tile_w(bn_scale) + tile_w(bn_shift)                    # (NH, WC)

    # ---- zero ONLY the 1-px border of the padded scratch (once, both convs) -
    pad_ref[:, 0:1, :] = jnp.zeros((N, 1, Lp), jnp.float32)
    pad_ref[:, Hp - 1:Hp, :] = jnp.zeros((N, 1, Lp), jnp.float32)
    pad_ref[:, :, 0:C] = jnp.zeros((N, Hp, C), jnp.float32)
    pad_ref[:, :, Lp - C:Lp] = jnp.zeros((N, Hp, C), jnp.float32)

    def conv3x3(wb_ref, b_ref):
        # 3 accumulated MXU matmuls (one per kernel row kh); the kw taps and
        # the cin->cout contraction are folded into the banded weight slabs,
        # so the activation side is just a contiguous-lane row window per kh.
        y = None
        for kh in range(3):
            tap = pad_ref[:, kh:kh + H, :].reshape(NH, Lp).astype(MXU_INPUT_DTYPE)
            p = jnp.dot(tap, wb_ref[kh], preferred_element_type=jnp.float32)
            y = p if y is None else y + p
        return y + b_ref[...]

    # conv_1 + PReLU (per-channel slope, pre-tiled over W)
    pad_ref[:, 1:H + 1, C:C + WC] = xbn.reshape(N, H, WC)
    y = conv3x3(wb1_ref, b1_ref)
    y = jnp.where(y > 0, y, y * pw_ref[...])

    # conv_2 (Cout == C for scale=1, downsample=False); border is still zero
    pad_ref[:, 1:H + 1, C:C + WC] = y.reshape(N, H, WC)
    y = conv3x3(wb2_ref, b2_ref)

    # residual add + lane-dense store, all in the packed (N, H, W*C) layout
    out_ref[...] = y.reshape(N, H, WC) + x_ref[...]


def _band_weights(w_hwio, W, dtype):
    """HWIO (3,3,Cin,Cout) -> (3, (W+2)*Cin, W*Cout) banded GEMM weights.

    band[kh][(w+kw)*Cin + ci, w*Cout + co] = w[kh, kw, ci, co]
    so that (padded_row_tap @ band[kh]) contracts kw and cin in one matmul.
    """
    Cin, Cout = w_hwio.shape[2], w_hwio.shape[3]
    slabs = []
    for kh in range(3):
        m = jnp.zeros(((W + 2) * Cin, W * Cout), jnp.float32)
        for kw in range(3):
            sel = jnp.eye(W + 2, W, k=-kw, dtype=jnp.float32)   # sel[w+kw, w] = 1
            m = m + jnp.kron(sel, w_hwio[kh, kw].astype(jnp.float32))
        slabs.append(m)
    return jnp.stack(slabs, axis=0).astype(dtype)


def res_block_forward(x_nchw, params):
    """ResBlock forward (scale=1, downsample=False). NCHW in / NCHW out."""
    # TODO(synk): for production accept/return NHWC end-to-end; these two
    # transposes each cost a full HBM round-trip of the activation.
    x = jnp.transpose(x_nchw, (0, 2, 3, 1)).astype(jnp.float32)   # NCHW -> NHWC
    N, H, W, C = x.shape
    Cout = params["w1"].shape[-1]
    assert Cout == C, "only scale=1, downsample=False is implemented"

    x_packed = x.reshape(N, H, W * C)                  # pack (W, C) onto lanes
    wb1 = _band_weights(params["w1"], W, MXU_INPUT_DTYPE)
    wb2 = _band_weights(params["w2"], W, MXU_INPUT_DTYPE)
    tile = lambda v: jnp.tile(v.reshape(1, C), (1, W))  # (1,C) -> (1,W*C)
    b1, b2, pw = tile(params["b1"]), tile(params["b2"]), tile(params["pw"])
    gamma = params["gamma"].reshape(1, C)
    beta = params["beta"].reshape(1, C)

    flops = 2 * (2 * (N * H) * ((W + 2) * C) * (W * C) * 3)       # two banded convs
    bytes_accessed = 4 * (2 * N * H * W * C) + 2 * int(wb1.size) * wb1.dtype.itemsize

    out = pl.pallas_call(
        _resblock_kernel,
        out_shape=jax.ShapeDtypeStruct((N, H, W * C), jnp.float32),
        in_specs=[pl.BlockSpec(memory_space=pltpu.MemorySpace.VMEM)] * 8,
        out_specs=pl.BlockSpec(memory_space=pltpu.MemorySpace.VMEM),
        scratch_shapes=[pltpu.VMEM((N, H + 2, (W + 2) * C), jnp.float32)],
        cost_estimate=pl.CostEstimate(flops=flops, transcendentals=0,
                                      bytes_accessed=bytes_accessed),
    )(x_packed, gamma, beta, wb1, b1, pw, wb2, b2)

    out = out.reshape(N, H, W, C)                      # free (row-major compatible)
    return jnp.transpose(out, (0, 3, 1, 2))            # NHWC -> NCHW


def ref_forward(x_nchw, p):
    """Pure-JAX reference (correctness check only)."""
    x = jnp.transpose(x_nchw, (0, 2, 3, 1)).astype(jnp.float32)
    mean = jnp.mean(x, axis=(0, 1, 2), keepdims=True)
    var = jnp.mean(jnp.square(x - mean), axis=(0, 1, 2), keepdims=True)
    xbn = (x - mean) * jax.lax.rsqrt(var + BN_EPS)
    xbn = xbn * p["gamma"].reshape(1, 1, 1, -1) + p["beta"].reshape(1, 1, 1, -1)
    y = jax.lax.conv_general_dilated(
        xbn, p["w1"], (1, 1), "SAME",
        dimension_numbers=("NHWC", "HWIO", "NHWC")) + p["b1"].reshape(1, 1, 1, -1)
    pw = p["pw"].reshape(1, 1, 1, -1)
    y = jnp.where(y > 0, y, y * pw)
    y = jax.lax.conv_general_dilated(
        y, p["w2"], (1, 1), "SAME",
        dimension_numbers=("NHWC", "HWIO", "NHWC")) + p["b2"].reshape(1, 1, 1, -1)
    y = y + x
    return jnp.transpose(y, (0, 3, 1, 2))


if __name__ == "__main__":
    key = jax.random.PRNGKey(0)
    ks = jax.random.split(key, 8)

    N, C, H, W = 2, 4, 16, 16            # in_chans=4, scale=1, downsample=False

    params = {
        "gamma": 1.0 + 0.1 * jax.random.normal(ks[0], (1, C), jnp.float32),
        "beta":  0.1 * jax.random.normal(ks[1], (1, C), jnp.float32),
        "w1":    0.2 * jax.random.normal(ks[2], (3, 3, C, C), jnp.float32),
        "b1":    0.1 * jax.random.normal(ks[3], (1, C), jnp.float32),
        "pw":    jnp.full((1, C), 0.25, jnp.float32),     # PReLU default slope
        "w2":    0.2 * jax.random.normal(ks[4], (3, 3, C, C), jnp.float32),
        "b2":    0.1 * jax.random.normal(ks[5], (1, C), jnp.float32),
    }
    x = jax.random.normal(ks[6], (N, C, H, W), jnp.float32)

    out = jax.block_until_ready(res_block_forward(x, params))
    ref = jax.block_until_ready(ref_forward(x, params))
    tol = 5e-4 if MXU_INPUT_DTYPE == jnp.float32 else 2e-2
    np.testing.assert_allclose(np.asarray(out), np.asarray(ref), rtol=tol, atol=tol)

    print("KERNEL_OK")
</pallas_src>

<mosaic_0001>
module attributes {stable_mosaic.version = 11 : i64} {
  func.func @_resblock_kernel(%arg0: memref<2x16x64xf32, #tpu.memory_space<vmem>>, %arg1: memref<1x4xf32, #tpu.memory_space<vmem>>, %arg2: memref<1x4xf32, #tpu.memory_space<vmem>>, %arg3: memref<3x72x64xf32, #tpu.memory_space<vmem>>, %arg4: memref<1x64xf32, #tpu.memory_space<vmem>>, %arg5: memref<1x64xf32, #tpu.memory_space<vmem>>, %arg6: memref<3x72x64xf32, #tpu.memory_space<vmem>>, %arg7: memref<1x64xf32, #tpu.memory_space<vmem>>, %arg8: memref<2x16x64xf32, #tpu.memory_space<vmem>>, %arg9: memref<2x18x72xf32, #tpu.memory_space<vmem>>) attributes {dimension_semantics = [], scalar_prefetch = 0 : i64, scratch_operands = 1 : i64, tpu.core_type = #tpu.core_type<tc>} {
    %c0 = arith.constant 0 : index
    %c0_0 = arith.constant 0 : index
    %c0_1 = arith.constant 0 : index
    %0 = vector.load %arg0[%c0, %c0_0, %c0_1] : memref<2x16x64xf32, #tpu.memory_space<vmem>>, vector<2x16x64xf32>
    %1 = vector.shape_cast %0 : vector<2x16x64xf32> to vector<32x64xf32>
    %cst = arith.constant dense<0.000000e+00> : vector<64xf32>
    %2 = vector.multi_reduction <add>, %1, %cst [0] : vector<32x64xf32> to vector<64xf32>
    %3 = vector.shape_cast %2 : vector<64xf32> to vector<1x64xf32>
    %4 = vector.extract_strided_slice %3 {offsets = [0, 0], sizes = [1, 4], strides = [1, 1]} : vector<1x64xf32> to vector<1x4xf32>
    %5 = vector.extract_strided_slice %3 {offsets = [0, 4], sizes = [1, 4], strides = [1, 1]} : vector<1x64xf32> to vector<1x4xf32>
    %6 = arith.addf %4, %5 : vector<1x4xf32>
    %7 = vector.extract_strided_slice %3 {offsets = [0, 8], sizes = [1, 4], strides = [1, 1]} : vector<1x64xf32> to vector<1x4xf32>
    %8 = arith.addf %6, %7 : vector<1x4xf32>
    %9 = vector.extract_strided_slice %3 {offsets = [0, 12], sizes = [1, 4], strides = [1, 1]} : vector<1x64xf32> to vector<1x4xf32>
    %10 = arith.addf %8, %9 : vector<1x4xf32>
    %11 = vector.extract_strided_slice %3 {offsets = [0, 16], sizes = [1, 4], strides = [1, 1]} : vector<1x64xf32> to vector<1x4xf32>
    %12 = arith.addf %10, %11 : vector<1x4xf32>
    %13 = vector.extract_strided_slice %3 {offsets = [0, 20], sizes = [1, 4], strides = [1, 1]} : vector<1x64xf32> to vector<1x4xf32>
    %14 = arith.addf %12, %13 : vector<1x4xf32>
    %15 = vector.extract_strided_slice %3 {offsets = [0, 24], sizes = [1, 4], strides = [1, 1]} : vector<1x64xf32> to vector<1x4xf32>
    %16 = arith.addf %14, %15 : vector<1x4xf32>
    %17 = vector.extract_strided_slice %3 {offsets = [0, 28], sizes = [1, 4], strides = [1, 1]} : vector<1x64xf32> to vector<1x4xf32>
    %18 = arith.addf %16, %17 : vector<1x4xf32>
    %19 = vector.extract_strided_slice %3 {offsets = [0, 32], sizes = [1, 4], strides = [1, 1]} : vector<1x64xf32> to vector<1x4xf32>
    %20 = arith.addf %18, %19 : vector<1x4xf32>
    %21 = vector.extract_strided_slice %3 {offsets = [0, 36], sizes = [1, 4], strides = [1, 1]} : vector<1x64xf32> to vector<1x4xf32>
    %22 = arith.addf %20, %21 : vector<1x4xf32>
    %23 = vector.extract_strided_slice %3 {offsets = [0, 40], sizes = [1, 4], strides = [1, 1]} : vector<1x64xf32> to vector<1x4xf32>
    %24 = arith.addf %22, %23 : vector<1x4xf32>
    %25 = vector.extract_strided_slice %3 {offsets = [0, 44], sizes = [1, 4], strides = [1, 1]} : vector<1x64xf32> to vector<1x4xf32>
    %26 = arith.addf %24, %25 : vector<1x4xf32>
    %27 = vector.extract_strided_slice %3 {offsets = [0, 48], sizes = [1, 4], strides = [1, 1]} : vector<1x64xf32> to vector<1x4xf32>
    %28 = arith.addf %26, %27 : vector<1x4xf32>
    %29 = vector.extract_strided_slice %3 {offsets = [0, 52], sizes = [1, 4], strides = [1, 1]} : vector<1x64xf32> to vector<1x4xf32>
    %30 = arith.addf %28, %29 : vector<1x4xf32>
    %31 = vector.extract_strided_slice %3 {offsets = [0, 56], sizes = [1, 4], strides = [1, 1]} : vector<1x64xf32> to vector<1x4xf32>
    %32 = arith.addf %30, %31 : vector<1x4xf32>
    %33 = vector.extract_strided_slice %3 {offsets = [0, 60], sizes = [1, 4], strides = [1, 1]} : vector<1x64xf32> to vector<1x4xf32>
    %34 = arith.addf %32, %33 : vector<1x4xf32>
    %cst_2 = arith.constant 0.001953125 : f32
    %35 = vector.broadcast %cst_2 : f32 to vector<1x4xf32>
    %36 = arith.mulf %34, %35 : vector<1x4xf32>
    %37 = tpu.concatenate %36, %36, %36, %36, %36, %36, %36, %36, %36, %36, %36, %36, %36, %36, %36, %36 in 1 : vector<1x4xf32>, vector<1x4xf32>, vector<1x4xf32>, vector<1x4xf32>, vector<1x4xf32>, vector<1x4xf32>, vector<1x4xf32>, vector<1x4xf32>, vector<1x4xf32>, vector<1x4xf32>, vector<1x4xf32>, vector<1x4xf32>, vector<1x4xf32>, vector<1x4xf32>, vector<1x4xf32>, vector<1x4xf32> -> vector<1x64xf32>
    %38 = vector.broadcast %37 : vector<1x64xf32> to vector<32x64xf32>
    %39 = arith.subf %1, %38 : vector<32x64xf32>
    %40 = arith.mulf %39, %39 : vector<32x64xf32>
    %cst_3 = arith.constant dense<0.000000e+00> : vector<64xf32>
    %41 = vector.multi_reduction <add>, %40, %cst_3 [0] : vector<32x64xf32> to vector<64xf32>
    %42 = vector.shape_cast %41 : vector<64xf32> to vector<1x64xf32>
    %43 = vector.extract_strided_slice %42 {offsets = [0, 0], sizes = [1, 4], strides = [1, 1]} : vector<1x64xf32> to vector<1x4xf32>
    %44 = vector.extract_strided_slice %42 {offsets = [0, 4], sizes = [1, 4], strides = [1, 1]} : vector<1x64xf32> to vector<1x4xf32>
    %45 = arith.addf %43, %44 : vector<1x4xf32>
    %46 = vector.extract_strided_slice %42 {offsets = [0, 8], sizes = [1, 4], strides = [1, 1]} : vector<1x64xf32> to vector<1x4xf32>
    %47 = arith.addf %45, %46 : vector<1x4xf32>
    %48 = vector.extract_strided_slice %42 {offsets = [0, 12], sizes = [1, 4], strides = [1, 1]} : vector<1x64xf32> to vector<1x4xf32>
    %49 = arith.addf %47, %48 : vector<1x4xf32>
    %50 = vector.extract_strided_slice %42 {offsets = [0, 16], sizes = [1, 4], strides = [1, 1]} : vector<1x64xf32> to vector<1x4xf32>
    %51 = arith.addf %49, %50 : vector<1x4xf32>
    %52 = vector.extract_strided_slice %42 {offsets = [0, 20], sizes = [1, 4], strides = [1, 1]} : vector<1x64xf32> to vector<1x4xf32>
    %53 = arith.addf %51, %52 : vector<1x4xf32>
    %54 = vector.extract_strided_slice %42 {offsets = [0, 24], sizes = [1, 4], strides = [1, 1]} : vector<1x64xf32> to vector<1x4xf32>
    %55 = arith.addf %53, %54 : vector<1x4xf32>
    %56 = vector.extract_strided_slice %42 {offsets = [0, 28], sizes = [1, 4], strides = [1, 1]} : vector<1x64xf32> to vector<1x4xf32>
    %57 = arith.addf %55, %56 : vector<1x4xf32>
    %58 = vector.extract_strided_slice %42 {offsets = [0, 32], sizes = [1, 4], strides = [1, 1]} : vector<1x64xf32> to vector<1x4xf32>
    %59 = arith.addf %57, %58 : vector<1x4xf32>
    %60 = vector.extract_strided_slice %42 {offsets = [0, 36], sizes = [1, 4], strides = [1, 1]} : vector<1x64xf32> to vector<1x4xf32>
    %61 = arith.addf %59, %60 : vector<1x4xf32>
    %62 = vector.extract_strided_slice %42 {offsets = [0, 40], sizes = [1, 4], strides = [1, 1]} : vector<1x64xf32> to vector<1x4xf32>
    %63 = arith.addf %61, %62 : vector<1x4xf32>
    %64 = vector.extract_strided_slice %42 {offsets = [0, 44], sizes = [1, 4], strides = [1, 1]} : vector<1x64xf32> to vector<1x4xf32>
    %65 = arith.addf %63, %64 : vector<1x4xf32>
    %66 = vector.extract_strided_slice %42 {offsets = [0, 48], sizes = [1, 4], strides = [1, 1]} : vector<1x64xf32> to vector<1x4xf32>
    %67 = arith.addf %65, %66 : vector<1x4xf32>
    %68 = vector.extract_strided_slice %42 {offsets = [0, 52], sizes = [1, 4], strides = [1, 1]} : vector<1x64xf32> to vector<1x4xf32>
    %69 = arith.addf %67, %68 : vector<1x4xf32>
    %70 = vector.extract_strided_slice %42 {offsets = [0, 56], sizes = [1, 4], strides = [1, 1]} : vector<1x64xf32> to vector<1x4xf32>
    %71 = arith.addf %69, %70 : vector<1x4xf32>
    %72 = vector.extract_strided_slice %42 {offsets = [0, 60], sizes = [1, 4], strides = [1, 1]} : vector<1x64xf32> to vector<1x4xf32>
    %73 = arith.addf %71, %72 : vector<1x4xf32>
    %cst_4 = arith.constant 0.001953125 : f32
    %74 = vector.broadcast %cst_4 : f32 to vector<1x4xf32>
    %75 = arith.mulf %73, %74 : vector<1x4xf32>
    %c0_5 = arith.constant 0 : index
    %c0_6 = arith.constant 0 : index
    %76 = vector.load %arg1[%c0_5, %c0_6] : memref<1x4xf32, #tpu.memory_space<vmem>>, vector<1x4xf32>
    %cst_7 = arith.constant 9.99999974E-6 : f32
    %77 = vector.broadcast %cst_7 : f32 to vector<1x4xf32>
    %78 = arith.addf %75, %77 : vector<1x4xf32>
    %79 = math.rsqrt %78 : vector<1x4xf32>
    %80 = arith.mulf %76, %79 : vector<1x4xf32>
    %c0_8 = arith.constant 0 : index
    %c0_9 = arith.constant 0 : index
    %81 = vector.load %arg2[%c0_8, %c0_9] : memref<1x4xf32, #tpu.memory_space<vmem>>, vector<1x4xf32>
    %82 = arith.mulf %36, %80 : vector<1x4xf32>
    %83 = arith.subf %81, %82 : vector<1x4xf32>
    %84 = tpu.concatenate %80, %80, %80, %80, %80, %80, %80, %80, %80, %80, %80, %80, %80, %80, %80, %80 in 1 : vector<1x4xf32>, vector<1x4xf32>, vector<1x4xf32>, vector<1x4xf32>, vector<1x4xf32>, vector<1x4xf32>, vector<1x4xf32>, vector<1x4xf32>, vector<1x4xf32>, vector<1x4xf32>, vector<1x4xf32>, vector<1x4xf32>, vector<1x4xf32>, vector<1x4xf32>, vector<1x4xf32>, vector<1x4xf32> -> vector<1x64xf32>
    %85 = vector.broadcast %84 : vector<1x64xf32> to vector<32x64xf32>
    %86 = arith.mulf %1, %85 : vector<32x64xf32>
    %87 = tpu.concatenate %83, %83, %83, %83, %83, %83, %83, %83, %83, %83, %83, %83, %83, %83, %83, %83 in 1 : vector<1x4xf32>, vector<1x4xf32>, vector<1x4xf32>, vector<1x4xf32>, vector<1x4xf32>, vector<1x4xf32>, vector<1x4xf32>, vector<1x4xf32>, vector<1x4xf32>, vector<1x4xf32>, vector<1x4xf32>, vector<1x4xf32>, vector<1x4xf32>, vector<1x4xf32>, vector<1x4xf32>, vector<1x4xf32> -> vector<1x64xf32>
    %88 = vector.broadcast %87 : vector<1x64xf32> to vector<32x64xf32>
    %89 = arith.addf %86, %88 : vector<32x64xf32>
    %cst_10 = arith.constant 0.000000e+00 : f32
    %90 = vector.broadcast %cst_10 : f32 to vector<2x1x72xf32>
    %c0_11 = arith.constant 0 : index
    %c0_12 = arith.constant 0 : index
    %c0_13 = arith.constant 0 : index
    %91 = vector.load %arg9[%c0_11, %c0_12, %c0_13] : memref<2x18x72xf32, #tpu.memory_space<vmem>>, vector<2x1x72xf32>
    tpu.vector_store %arg9[%c0_11, %c0_12, %c0_13], %90 {strides = array<i32>} : memref<2x18x72xf32, #tpu.memory_space<vmem>>, vector<2x1x72xf32>,
    %cst_14 = arith.constant 0.000000e+00 : f32
    %92 = vector.broadcast %cst_14 : f32 to vector<2x1x72xf32>
    %c0_15 = arith.constant 0 : index
    %c17 = arith.constant 17 : index
    %c0_16 = arith.constant 0 : index
    %93 = vector.load %arg9[%c0_15, %c17, %c0_16] : memref<2x18x72xf32, #tpu.memory_space<vmem>>, vector<2x1x72xf32>
    tpu.vector_store %arg9[%c0_15, %c17, %c0_16], %92 {strides = array<i32>} : memref<2x18x72xf32, #tpu.memory_space<vmem>>, vector<2x1x72xf32>,
    %cst_17 = arith.constant 0.000000e+00 : f32
    %94 = vector.broadcast %cst_17 : f32 to vector<2x18x4xf32>
    %c0_18 = arith.constant 0 : index
    %c0_19 = arith.constant 0 : index
    %c0_20 = arith.constant 0 : index
    %95 = vector.load %arg9[%c0_18, %c0_19, %c0_20] : memref<2x18x72xf32, #tpu.memory_space<vmem>>, vector<2x18x4xf32>
    tpu.vector_store %arg9[%c0_18, %c0_19, %c0_20], %94 {strides = array<i32>} : memref<2x18x72xf32, #tpu.memory_space<vmem>>, vector<2x18x4xf32>,
    %cst_21 = arith.constant 0.000000e+00 : f32
    %96 = vector.broadcast %cst_21 : f32 to vector<2x18x4xf32>
    %c0_22 = arith.constant 0 : index
    %c0_23 = arith.constant 0 : index
    %c68 = arith.constant 68 : index
    %97 = vector.load %arg9[%c0_22, %c0_23, %c68] : memref<2x18x72xf32, #tpu.memory_space<vmem>>, vector<2x18x4xf32>
    tpu.vector_store %arg9[%c0_22, %c0_23, %c68], %96 {strides = array<i32>} : memref<2x18x72xf32, #tpu.memory_space<vmem>>, vector<2x18x4xf32>,
    %98 = vector.shape_cast %89 : vector<32x64xf32> to vector<2x16x64xf32>
    %c0_24 = arith.constant 0 : index
    %c1 = arith.constant 1 : index
    %c4 = arith.constant 4 : index
    %99 = vector.load %arg9[%c0_24, %c1, %c4] : memref<2x18x72xf32, #tpu.memory_space<vmem>>, vector<2x16x64xf32>
    tpu.vector_store %arg9[%c0_24, %c1, %c4], %98 {strides = array<i32>} : memref<2x18x72xf32, #tpu.memory_space<vmem>>, vector<2x16x64xf32>,
    %c0_25 = arith.constant 0 : index
    %c0_26 = arith.constant 0 : index
    %c0_27 = arith.constant 0 : index
    %100 = vector.load %arg9[%c0_25, %c0_26, %c0_27] : memref<2x18x72xf32, #tpu.memory_space<vmem>>, vector<2x16x72xf32>
    %101 = vector.shape_cast %100 : vector<2x16x72xf32> to vector<32x72xf32>
    %c0_28 = arith.constant 0 : index
    %c0_29 = arith.constant 0 : index
    %c0_30 = arith.constant 0 : index
    %102 = vector.load %arg3[%c0_28, %c0_29, %c0_30] : memref<3x72x64xf32, #tpu.memory_space<vmem>>, vector<1x72x64xf32>
    %103 = vector.shape_cast %102 : vector<1x72x64xf32> to vector<72x64xf32>
    %cst_31 = arith.constant dense<0.000000e+00> : vector<32x64xf32>
    %104 = tpu.matmul %101, %103, %cst_31 {dimension_numbers = #tpu.dot_dimension_numbers<[1], [0], [0], [1], [0, 0, 1, 1], [], []>} : vector<32x72xf32>, vector<72x64xf32>, vector<32x64xf32> -> vector<32x64xf32>
    %c0_32 = arith.constant 0 : index
    %c1_33 = arith.constant 1 : index
    %c0_34 = arith.constant 0 : index
    %105 = vector.load %arg9[%c0_32, %c1_33, %c0_34] : memref<2x18x72xf32, #tpu.memory_space<vmem>>, vector<2x16x72xf32>
    %106 = vector.shape_cast %105 : vector<2x16x72xf32> to vector<32x72xf32>
    %c1_35 = arith.constant 1 : index
    %c0_36 = arith.constant 0 : index
    %c0_37 = arith.constant 0 : index
    %107 = vector.load %arg3[%c1_35, %c0_36, %c0_37] : memref<3x72x64xf32, #tpu.memory_space<vmem>>, vector<1x72x64xf32>
    %108 = vector.shape_cast %107 : vector<1x72x64xf32> to vector<72x64xf32>
    %cst_38 = arith.constant dense<0.000000e+00> : vector<32x64xf32>
    %109 = tpu.matmul %106, %108, %cst_38 {dimension_numbers = #tpu.dot_dimension_numbers<[1], [0], [0], [1], [0, 0, 1, 1], [], []>} : vector<32x72xf32>, vector<72x64xf32>, vector<32x64xf32> -> vector<32x64xf32>
    %110 = arith.addf %104, %109 : vector<32x64xf32>
    %c0_39 = arith.constant 0 : index
    %c2 = arith.constant 2 : index
    %c0_40 = arith.constant 0 : index
    %111 = vector.load %arg9[%c0_39, %c2, %c0_40] : memref<2x18x72xf32, #tpu.memory_space<vmem>>, vector<2x16x72xf32>
    %112 = vector.shape_cast %111 : vector<2x16x72xf32> to vector<32x72xf32>
    %c2_41 = arith.constant 2 : index
    %c0_42 = arith.constant 0 : index
    %c0_43 = arith.constant 0 : index
    %113 = vector.load %arg3[%c2_41, %c0_42, %c0_43] : memref<3x72x64xf32, #tpu.memory_space<vmem>>, vector<1x72x64xf32>
    %114 = vector.shape_cast %113 : vector<1x72x64xf32> to vector<72x64xf32>
    %cst_44 = arith.constant dense<0.000000e+00> : vector<32x64xf32>
    %115 = tpu.matmul %112, %114, %cst_44 {dimension_numbers = #tpu.dot_dimension_numbers<[1], [0], [0], [1], [0, 0, 1, 1], [], []>} : vector<32x72xf32>, vector<72x64xf32>, vector<32x64xf32> -> vector<32x64xf32>
    %116 = arith.addf %110, %115 : vector<32x64xf32>
    %c0_45 = arith.constant 0 : index
    %c0_46 = arith.constant 0 : index
    %117 = vector.load %arg4[%c0_45, %c0_46] : memref<1x64xf32, #tpu.memory_space<vmem>>, vector<1x64xf32>
    %118 = vector.broadcast %117 : vector<1x64xf32> to vector<32x64xf32>
    %119 = arith.addf %116, %118 : vector<32x64xf32>
    %cst_47 = arith.constant 0.000000e+00 : f32
    %120 = vector.broadcast %cst_47 : f32 to vector<32x64xf32>
    %121 = arith.cmpf ogt, %119, %120 : vector<32x64xf32>
    %c0_48 = arith.constant 0 : index
    %c0_49 = arith.constant 0 : index
    %122 = vector.load %arg5[%c0_48, %c0_49] : memref<1x64xf32, #tpu.memory_space<vmem>>, vector<1x64xf32>
    %123 = vector.broadcast %122 : vector<1x64xf32> to vector<32x64xf32>
    %124 = arith.mulf %119, %123 : vector<32x64xf32>
    %125 = arith.select %121, %119, %124 : vector<32x64xi1>, vector<32x64xf32>
    %126 = vector.shape_cast %125 : vector<32x64xf32> to vector<2x16x64xf32>
    %c0_50 = arith.constant 0 : index
    %c1_51 = arith.constant 1 : index
    %c4_52 = arith.constant 4 : index
    %127 = vector.load %arg9[%c0_50, %c1_51, %c4_52] : memref<2x18x72xf32, #tpu.memory_space<vmem>>, vector<2x16x64xf32>
    tpu.vector_store %arg9[%c0_50, %c1_51, %c4_52], %126 {strides = array<i32>} : memref<2x18x72xf32, #tpu.memory_space<vmem>>, vector<2x16x64xf32>,
    %c0_53 = arith.constant 0 : index
    %c0_54 = arith.constant 0 : index
    %c0_55 = arith.constant 0 : index
    %128 = vector.load %arg9[%c0_53, %c0_54, %c0_55] : memref<2x18x72xf32, #tpu.memory_space<vmem>>, vector<2x16x72xf32>
    %129 = vector.shape_cast %128 : vector<2x16x72xf32> to vector<32x72xf32>
    %c0_56 = arith.constant 0 : index
    %c0_57 = arith.constant 0 : index
    %c0_58 = arith.constant 0 : index
    %130 = vector.load %arg6[%c0_56, %c0_57, %c0_58] : memref<3x72x64xf32, #tpu.memory_space<vmem>>, vector<1x72x64xf32>
    %131 = vector.shape_cast %130 : vector<1x72x64xf32> to vector<72x64xf32>
    %cst_59 = arith.constant dense<0.000000e+00> : vector<32x64xf32>
    %132 = tpu.matmul %129, %131, %cst_59 {dimension_numbers = #tpu.dot_dimension_numbers<[1], [0], [0], [1], [0, 0, 1, 1], [], []>} : vector<32x72xf32>, vector<72x64xf32>, vector<32x64xf32> -> vector<32x64xf32>
    %c0_60 = arith.constant 0 : index
    %c1_61 = arith.constant 1 : index
    %c0_62 = arith.constant 0 : index
    %133 = vector.load %arg9[%c0_60, %c1_61, %c0_62] : memref<2x18x72xf32, #tpu.memory_space<vmem>>, vector<2x16x72xf32>
    %134 = vector.shape_cast %133 : vector<2x16x72xf32> to vector<32x72xf32>
    %c1_63 = arith.constant 1 : index
    %c0_64 = arith.constant 0 : index
    %c0_65 = arith.constant 0 : index
    %135 = vector.load %arg6[%c1_63, %c0_64, %c0_65] : memref<3x72x64xf32, #tpu.memory_space<vmem>>, vector<1x72x64xf32>
    %136 = vector.shape_cast %135 : vector<1x72x64xf32> to vector<72x64xf32>
    %cst_66 = arith.constant dense<0.000000e+00> : vector<32x64xf32>
    %137 = tpu.matmul %134, %136, %cst_66 {dimension_numbers = #tpu.dot_dimension_numbers<[1], [0], [0], [1], [0, 0, 1, 1], [], []>} : vector<32x72xf32>, vector<72x64xf32>, vector<32x64xf32> -> vector<32x64xf32>
    %138 = arith.addf %132, %137 : vector<32x64xf32>
    %c0_67 = arith.constant 0 : index
    %c2_68 = arith.constant 2 : index
    %c0_69 = arith.constant 0 : index
    %139 = vector.load %arg9[%c0_67, %c2_68, %c0_69] : memref<2x18x72xf32, #tpu.memory_space<vmem>>, vector<2x16x72xf32>
    %140 = vector.shape_cast %139 : vector<2x16x72xf32> to vector<32x72xf32>
    %c2_70 = arith.constant 2 : index
    %c0_71 = arith.constant 0 : index
    %c0_72 = arith.constant 0 : index
    %141 = vector.load %arg6[%c2_70, %c0_71, %c0_72] : memref<3x72x64xf32, #tpu.memory_space<vmem>>, vector<1x72x64xf32>
    %142 = vector.shape_cast %141 : vector<1x72x64xf32> to vector<72x64xf32>
    %cst_73 = arith.constant dense<0.000000e+00> : vector<32x64xf32>
    %143 = tpu.matmul %140, %142, %cst_73 {dimension_numbers = #tpu.dot_dimension_numbers<[1], [0], [0], [1], [0, 0, 1, 1], [], []>} : vector<32x72xf32>, vector<72x64xf32>, vector<32x64xf32> -> vector<32x64xf32>
    %144 = arith.addf %138, %143 : vector<32x64xf32>
    %c0_74 = arith.constant 0 : index
    %c0_75 = arith.constant 0 : index
    %145 = vector.load %arg7[%c0_74, %c0_75] : memref<1x64xf32, #tpu.memory_space<vmem>>, vector<1x64xf32>
    %146 = vector.broadcast %145 : vector<1x64xf32> to vector<32x64xf32>
    %147 = arith.addf %144, %146 : vector<32x64xf32>
    %148 = vector.shape_cast %147 : vector<32x64xf32> to vector<2x16x64xf32>
    %c0_76 = arith.constant 0 : index
    %c0_77 = arith.constant 0 : index
    %c0_78 = arith.constant 0 : index
    %149 = vector.load %arg0[%c0_76, %c0_77, %c0_78] : memref<2x16x64xf32, #tpu.memory_space<vmem>>, vector<2x16x64xf32>
    %150 = arith.addf %148, %149 : vector<2x16x64xf32>
    %c0_79 = arith.constant 0 : index
    %c0_80 = arith.constant 0 : index
    %c0_81 = arith.constant 0 : index
    %151 = vector.load %arg8[%c0_79, %c0_80, %c0_81] : memref<2x16x64xf32, #tpu.memory_space<vmem>>, vector<2x16x64xf32>
    tpu.vector_store %arg8[%c0_79, %c0_80, %c0_81], %150 {strides = array<i32>} : memref<2x16x64xf32, #tpu.memory_space<vmem>>, vector<2x16x64xf32>,
    return
  }
}

</mosaic_0001>

<llo_original>
// kernel: tpu_custom_call.1
$region0: #{tpu_custom_call.1}
  #allocation0 [shape = 'u32[]', space=smem, size = 0x4, offset = 0x4, fixed_abs, tag = 'smem constant byte address 0x4 - core index']
  #allocation1 [shape = 'u32[144,128]{1,0:T(1,128)}', space=vmem, size = 0x12000, scoped, tag = 'internal scratch']
  #allocation2 [shape = 'f32[2,18,72]{2,1,0:T(8,128)}', space=vmem, size = 0x6000, scoped, tag = 'scratch operand']
  %s0 = inlined_call_operand.vmem [shape: f32[2,16,64], index: 0, kind: input, shape index: {}]
  %s1 = inlined_call_operand.vmem [shape: f32[1,4], index: 1, kind: input, shape index: {}]
  %s2 = inlined_call_operand.vmem [shape: f32[1,4], index: 2, kind: input, shape index: {}]
  %s3 = inlined_call_operand.vmem [shape: f32[3,72,64], index: 3, kind: input, shape index: {}]
  %s4 = inlined_call_operand.vmem [shape: f32[1,64], index: 4, kind: input, shape index: {}]
  %s5 = inlined_call_operand.vmem [shape: f32[1,64], index: 5, kind: input, shape index: {}]
  %s6 = inlined_call_operand.vmem [shape: f32[3,72,64], index: 6, kind: input, shape index: {}]
  %s7 = inlined_call_operand.vmem [shape: f32[1,64], index: 7, kind: input, shape index: {}]
  %s8 = inlined_call_operand.hbm [shape: f32[2,16,64], index: 8, kind: output, shape index: {}]
  %s9 = sld [smem:[#allocation0]]
  $region42: #{tpu_custom_call.1} parent=0
    _
  %s11 = ssub.s32 1, %s9
  %s12 = scalar_select 0, %s11, %s9
  $region1: #{tpu_custom_call.1} parent=0
    #allocation3 [shape = 'u8[16384]{0}', space=vmem, size = 0x4000, scoped, tag = 'output window, operand 0, single buffered']
    #allocation4 [shape = 's32[1]{0}', space=sflag, size = 0x4, scoped, tag = 'scoped memory for tpu_custom_call.1']
    %13 = vsyncpa [#allocation4], 0
    // Predicated region
    $region2: #{tpu_custom_call.1} parent=1 // pred_check
      _
    $region3: #{tpu_custom_call.1} parent=1 // pred_check_branch
      %15 = sbr.rel (0) target = $region5
    $region4: #{tpu_custom_call.1} parent=1 // pred_region
      _
    $region5: #{tpu_custom_call.1} parent=1 // pred_fallthru
      _
    // Predicated region
    $region6: #{tpu_custom_call.1} parent=1 // pred_check
      _
    $region7: #{tpu_custom_call.1} parent=1 // pred_check_branch
      %17 = sbr.rel (0) target = $region9
    $region8: #{tpu_custom_call.1} parent=1 // pred_region
      _
    $region9: #{tpu_custom_call.1} parent=1 // pred_fallthru
      _
    // Predicated region
    $region10: #{tpu_custom_call.1} parent=1 // pred_check
      _
    $region11: #{tpu_custom_call.1} parent=1 // pred_check_branch
      %19 = sbr.rel (0) target = $region13
    $region12: #{tpu_custom_call.1} parent=1 // pred_region
      _
    $region13: #{tpu_custom_call.1} parent=1 // pred_fallthru
      _
    // Predicated region
    $region14: #{tpu_custom_call.1} parent=1 // pred_check
      _
    $region15: #{tpu_custom_call.1} parent=1 // pred_check_branch
      %21 = sbr.rel (0) target = $region17
    $region16: #{tpu_custom_call.1} parent=1 // pred_region
      _
    $region17: #{tpu_custom_call.1} parent=1 // pred_fallthru
      _
    // Predicated region
    $region18: #{tpu_custom_call.1} parent=1 // pred_check
      _
    $region19: #{tpu_custom_call.1} parent=1 // pred_check_branch
      %23 = sbr.rel (0) target = $region21
    $region20: #{tpu_custom_call.1} parent=1 // pred_region
      _
    $region21: #{tpu_custom_call.1} parent=1 // pred_fallthru
      _
    // Predicated region
    $region22: #{tpu_custom_call.1} parent=1 // pred_check
      _
    $region23: #{tpu_custom_call.1} parent=1 // pred_check_branch
      %25 = sbr.rel (0) target = $region25
    $region24: #{tpu_custom_call.1} parent=1 // pred_region
      _
    $region25: #{tpu_custom_call.1} parent=1 // pred_fallthru
      _
    // Predicated region
    $region26: #{tpu_custom_call.1} parent=1 // pred_check
      _
    $region27: #{tpu_custom_call.1} parent=1 // pred_check_branch
      %27 = sbr.rel (0) target = $region29
    $region28: #{tpu_custom_call.1} parent=1 // pred_region
      _
    $region29: #{tpu_custom_call.1} parent=1 // pred_fallthru
      _
    // Predicated region
    $region30: #{tpu_custom_call.1} parent=1 // pred_check
      _
    $region31: #{tpu_custom_call.1} parent=1 // pred_check_branch
      %29 = sbr.rel (0) target = $region33
    $region32: #{tpu_custom_call.1} parent=1 // pred_region
      _
    $region33: #{tpu_custom_call.1} parent=1 // pred_fallthru
      _
    %v30 = vld [vmem:[%s0] sm:$0xff]
    %v31 = vld [vmem:[%s0 + $0x8] sm:$0xff]
    %v32 = vld [vmem:[%s0 + $0x10] sm:$0xff]
    %v33 = vld [vmem:[%s0 + $0x18] sm:$0xff]
    %vm34 = vcmask 523264
    %v35 = vsel %vm34, %v30, 0.0
    %v36 = vsel %vm34, %v31, 0.0
    %v37 = vadd.f32 %v35, %v36
    %v38 = vsel %vm34, %v32, 0.0
    %v39 = vadd.f32 %v37, %v38
    %v40 = vsel %vm34, %v33, 0.0
    %v41 = vadd.f32 %v39, %v40
    %v42 = vrot.slane %v41, 4
    %v43 = vadd.f32 %v41, %v42
    %v44 = vrot.slane %v43, 2
    %v45 = vadd.f32 %v43, %v44
    %v46 = vrot.slane %v45, 1
    %v47 = vadd.f32 %v45, %v46
    %49 = vrot.lane.b32.xlu0 %v47, 124
    %v50 = vpop.permute.xlu0 %49
    %v52 = vadd.f32 %v47, %v50
    %53 = vrot.lane.b32.xlu0 %v47, 120
    %v54 = vpop.permute.xlu0 %53
    %v56 = vadd.f32 %v52, %v54
    %57 = vrot.lane.b32.xlu0 %v47, 116
    %v58 = vpop.permute.xlu0 %57
    %v60 = vadd.f32 %v56, %v58
    %61 = vrot.lane.b32.xlu0 %v47, 112
    %v62 = vpop.permute.xlu0 %61
    %v64 = vadd.f32 %v60, %v62
    %65 = vrot.lane.b32.xlu0 %v47, 108
    %v66 = vpop.permute.xlu0 %65
    %v68 = vadd.f32 %v64, %v66
    %69 = vrot.lane.b32.xlu0 %v47, 104
    %v70 = vpop.permute.xlu0 %69
    %v72 = vadd.f32 %v68, %v70
    %73 = vrot.lane.b32.xlu0 %v47, 100
    %v74 = vpop.permute.xlu0 %73
    %v76 = vadd.f32 %v72, %v74
    %77 = vrot.lane.b32.xlu0 %v47, 96
    %v78 = vpop.permute.xlu0 %77
    %v80 = vadd.f32 %v76, %v78
    %81 = vrot.lane.b32.xlu0 %v47, 92
    %v82 = vpop.permute.xlu0 %81
    %v84 = vadd.f32 %v80, %v82
    %85 = vrot.lane.b32.xlu0 %v47, 88
    %v86 = vpop.permute.xlu0 %85
    %v88 = vadd.f32 %v84, %v86
    %89 = vrot.lane.b32.xlu0 %v47, 84
    %v90 = vpop.permute.xlu0 %89
    %v92 = vadd.f32 %v88, %v90
    %93 = vrot.lane.b32.xlu0 %v47, 80
    %v94 = vpop.permute.xlu0 %93
    %v96 = vadd.f32 %v92, %v94
    %97 = vrot.lane.b32.xlu0 %v47, 76
    %v98 = vpop.permute.xlu0 %97
    %v100 = vadd.f32 %v96, %v98
    %101 = vrot.lane.b32.xlu0 %v47, 72
    %v102 = vpop.permute.xlu0 %101
    %v104 = vadd.f32 %v100, %v102
    %105 = vrot.lane.b32.xlu0 %v47, 68
    %v106 = vpop.permute.xlu0 %105
    %v108 = vadd.f32 %v104, %v106
    %v109 = vmul.f32 %v108, 0.001953125
    %111 = vrot.lane.b32.xlu0 %v109, 4
    %v112 = vpop.permute.xlu0 %111
    %114 = vrot.lane.b32.xlu0 %v109, 8
    %v115 = vpop.permute.xlu0 %114
    %117 = vrot.lane.b32.xlu0 %v109, 12
    %v118 = vpop.permute.xlu0 %117
    %120 = vrot.lane.b32.xlu0 %v109, 16
    %v121 = vpop.permute.xlu0 %120
    %123 = vrot.lane.b32.xlu0 %v109, 20
    %v124 = vpop.permute.xlu0 %123
    %126 = vrot.lane.b32.xlu0 %v109, 24
    %v127 = vpop.permute.xlu0 %126
    %129 = vrot.lane.b32.xlu0 %v109, 28
    %v130 = vpop.permute.xlu0 %129
    %132 = vrot.lane.b32.xlu0 %v109, 32
    %v133 = vpop.permute.xlu0 %132
    %135 = vrot.lane.b32.xlu0 %v109, 36
    %v136 = vpop.permute.xlu0 %135
    %138 = vrot.lane.b32.xlu0 %v109, 40
    %v139 = vpop.permute.xlu0 %138
    %141 = vrot.lane.b32.xlu0 %v109, 44
    %v142 = vpop.permute.xlu0 %141
    %144 = vrot.lane.b32.xlu0 %v109, 48
    %v145 = vpop.permute.xlu0 %144
    %147 = vrot.lane.b32.xlu0 %v109, 52
    %v148 = vpop.permute.xlu0 %147
    %150 = vrot.lane.b32.xlu0 %v109, 56
    %v151 = vpop.permute.xlu0 %150
    %153 = vrot.lane.b32.xlu0 %v109, 60
    %v154 = vpop.permute.xlu0 %153
    %vm156 = vcmask 31744
    %v157 = vsel %vm156, %v109, %v112
    %vm158 = vcmask 64512
    %v159 = vsel %vm158, %v157, %v115
    %vm160 = vcmask 97280
    %v161 = vsel %vm160, %v159, %v118
    %vm162 = vcmask 130048
    %v163 = vsel %vm162, %v161, %v121
    %vm164 = vcmask 162816
    %v165 = vsel %vm164, %v163, %v124
    %vm166 = vcmask 195584
    %v167 = vsel %vm166, %v165, %v127
    %vm168 = vcmask 228352
    %v169 = vsel %vm168, %v167, %v130
    %vm170 = vcmask 261120
    %v171 = vsel %vm170, %v169, %v133
    %vm172 = vcmask 293888
    %v173 = vsel %vm172, %v171, %v136
    %vm174 = vcmask 326656
    %v175 = vsel %vm174, %v173, %v139
    %vm176 = vcmask 359424
    %v177 = vsel %vm176, %v175, %v142
    %vm178 = vcmask 392192
    %v179 = vsel %vm178, %v177, %v145
    %vm180 = vcmask 424960
    %v181 = vsel %vm180, %v179, %v148
    %vm182 = vcmask 457728
    %v183 = vsel %vm182, %v181, %v151
    %vm184 = vcmask 490496
    %v185 = vsel %vm184, %v183, %v154
    %v186 = vlaneseq
    %v187 = vshrl.u32 %v186, 7
    %v188 = vsub.s32 0, %v187
    %v189 = vrot.slane %v185, %v188
    %v190 = vsub.f32 %v30, %v189
    %v191 = vsub.f32 %v31, %v189
    %v192 = vsub.f32 %v32, %v189
    %v193 = vsub.f32 %v33, %v189
    %v194 = vmul.f32 %v190, %v190
    %v195 = vmul.f32 %v191, %v191
    %v196 = vmul.f32 %v192, %v192
    %v197 = vmul.f32 %v193, %v193
    %v198 = vsel %vm34, %v194, 0.0
    %v199 = vsel %vm34, %v195, 0.0
    %v200 = vadd.f32 %v198, %v199
    %v201 = vsel %vm34, %v196, 0.0
    %v202 = vadd.f32 %v200, %v201
    %v203 = vsel %vm34, %v197, 0.0
    %v204 = vadd.f32 %v202, %v203
    %v205 = vrot.slane %v204, 4
    %v206 = vadd.f32 %v204, %v205
    %v207 = vrot.slane %v206, 2
    %v208 = vadd.f32 %v206, %v207
    %v209 = vrot.slane %v208, 1
    %v210 = vadd.f32 %v208, %v209
    %212 = vrot.lane.b32.xlu0 %v210, 124
    %v213 = vpop.permute.xlu0 %212
    %v215 = vadd.f32 %v210, %v213
    %216 = vrot.lane.b32.xlu0 %v210, 120
    %v217 = vpop.permute.xlu0 %216
    %v219 = vadd.f32 %v215, %v217
    %220 = vrot.lane.b32.xlu0 %v210, 116
    %v221 = vpop.permute.xlu0 %220
    %v223 = vadd.f32 %v219, %v221
    %224 = vrot.lane.b32.xlu0 %v210, 112
    %v225 = vpop.permute.xlu0 %224
    %v227 = vadd.f32 %v223, %v225
    %228 = vrot.lane.b32.xlu0 %v210, 108
    %v229 = vpop.permute.xlu0 %228
    %v231 = vadd.f32 %v227, %v229
    %232 = vrot.lane.b32.xlu0 %v210, 104
    %v233 = vpop.permute.xlu0 %232
    %v235 = vadd.f32 %v231, %v233
    %236 = vrot.lane.b32.xlu0 %v210, 100
    %v237 = vpop.permute.xlu0 %236
    %v239 = vadd.f32 %v235, %v237
    %240 = vrot.lane.b32.xlu0 %v210, 96
    %v241 = vpop.permute.xlu0 %240
    %v243 = vadd.f32 %v239, %v241
    %244 = vrot.lane.b32.xlu0 %v210, 92
    %v245 = vpop.permute.xlu0 %244
    %v247 = vadd.f32 %v243, %v245
    %248 = vrot.lane.b32.xlu0 %v210, 88
    %v249 = vpop.permute.xlu0 %248
    %v251 = vadd.f32 %v247, %v249
    %252 = vrot.lane.b32.xlu0 %v210, 84
    %v253 = vpop.permute.xlu0 %252
    %v255 = vadd.f32 %v251, %v253
    %256 = vrot.lane.b32.xlu0 %v210, 80
    %v257 = vpop.permute.xlu0 %256
    %v259 = vadd.f32 %v255, %v257
    %260 = vrot.lane.b32.xlu0 %v210, 76
    %v261 = vpop.permute.xlu0 %260
    %v263 = vadd.f32 %v259, %v261
    %264 = vrot.lane.b32.xlu0 %v210, 72
    %v265 = vpop.permute.xlu0 %264
    %v267 = vadd.f32 %v263, %v265
    %268 = vrot.lane.b32.xlu0 %v210, 68
    %v269 = vpop.permute.xlu0 %268
    %v271 = vadd.f32 %v267, %v269
    %v272 = vmul.f32 %v271, 0.001953125
    %v273 = vld [vmem:[%s1] sm:$0x1]
    %v274 = vadd.f32 %v272, 1e-05
    %v275 = vrsqrt.pop %v274
    %v276 = vmul.f32 %v273, %v275
    %v277 = vld [vmem:[%s2] sm:$0x1]
    %v278 = vmul.f32 %v109, %v276
    %v279 = vsub.f32 %v277, %v278
    %v281 = vlaneseq
    %v282 = vshrl.u32 %v281, 7
    %v283 = vsub.s32 0, %v282
    %v284 = vrot.slane %v276, %v283
    %285 = vrot.lane.b32.xlu0 %v284, 4
    %v286 = vpop.permute.xlu0 %285
    %288 = vrot.lane.b32.xlu0 %v284, 8
    %v289 = vpop.permute.xlu0 %288
    %291 = vrot.lane.b32.xlu0 %v284, 12
    %v292 = vpop.permute.xlu0 %291
    %294 = vrot.lane.b32.xlu0 %v284, 16
    %v295 = vpop.permute.xlu0 %294
    %297 = vrot.lane.b32.xlu0 %v284, 20
    %v298 = vpop.permute.xlu0 %297
    %300 = vrot.lane.b32.xlu0 %v284, 24
    %v301 = vpop.permute.xlu0 %300
    %303 = vrot.lane.b32.xlu0 %v284, 28
    %v304 = vpop.permute.xlu0 %303
    %306 = vrot.lane.b32.xlu0 %v284, 32
    %v307 = vpop.permute.xlu0 %306
    %309 = vrot.lane.b32.xlu0 %v284, 36
    %v310 = vpop.permute.xlu0 %309
    %312 = vrot.lane.b32.xlu0 %v284, 40
    %v313 = vpop.permute.xlu0 %312
    %315 = vrot.lane.b32.xlu0 %v284, 44
    %v316 = vpop.permute.xlu0 %315
    %318 = vrot.lane.b32.xlu0 %v284, 48
    %v319 = vpop.permute.xlu0 %318
    %321 = vrot.lane.b32.xlu0 %v284, 52
    %v322 = vpop.permute.xlu0 %321
    %324 = vrot.lane.b32.xlu0 %v284, 56
    %v325 = vpop.permute.xlu0 %324
    %327 = vrot.lane.b32.xlu0 %v284, 60
    %v328 = vpop.permute.xlu0 %327
    %v330 = vsel %vm156, %v276, %v286
    %v331 = vsel %vm158, %v330, %v289
    %v332 = vsel %vm160, %v331, %v292
    %v333 = vsel %vm162, %v332, %v295
    %v334 = vsel %vm164, %v333, %v298
    %v335 = vsel %vm166, %v334, %v301
    %v336 = vsel %vm168, %v335, %v304
    %v337 = vsel %vm170, %v336, %v307
    %v338 = vsel %vm172, %v337, %v310
    %v339 = vsel %vm174, %v338, %v313
    %v340 = vsel %vm176, %v339, %v316
    %v341 = vsel %vm178, %v340, %v319
    %v342 = vsel %vm180, %v341, %v322
    %v343 = vsel %vm182, %v342, %v325
    %v344 = vsel %vm184, %v343, %v328
    %v345 = vlaneseq
    %v346 = vshrl.u32 %v345, 7
    %v347 = vsub.s32 0, %v346
    %v348 = vrot.slane %v344, %v347
    %v349 = vmul.f32 %v30, %v348
    %v350 = vmul.f32 %v31, %v348
    %v351 = vmul.f32 %v32, %v348
    %v352 = vmul.f32 %v33, %v348
    %v354 = vlaneseq
    %v355 = vshrl.u32 %v354, 7
    %v356 = vsub.s32 0, %v355
    %v357 = vrot.slane %v279, %v356
    %358 = vrot.lane.b32.xlu0 %v357, 4
    %v359 = vpop.permute.xlu0 %358
    %361 = vrot.lane.b32.xlu0 %v357, 8
    %v362 = vpop.permute.xlu0 %361
    %364 = vrot.lane.b32.xlu0 %v357, 12
    %v365 = vpop.permute.xlu0 %364
    %367 = vrot.lane.b32.xlu0 %v357, 16
    %v368 = vpop.permute.xlu0 %367
    %370 = vrot.lane.b32.xlu0 %v357, 20
    %v371 = vpop.permute.xlu0 %370
    %373 = vrot.lane.b32.xlu0 %v357, 24
    %v374 = vpop.permute.xlu0 %373
    %376 = vrot.lane.b32.xlu0 %v357, 28
    %v377 = vpop.permute.xlu0 %376
    %379 = vrot.lane.b32.xlu0 %v357, 32
    %v380 = vpop.permute.xlu0 %379
    %382 = vrot.lane.b32.xlu0 %v357, 36
    %v383 = vpop.permute.xlu0 %382
    %385 = vrot.lane.b32.xlu0 %v357, 40
    %v386 = vpop.permute.xlu0 %385
    %388 = vrot.lane.b32.xlu0 %v357, 44
    %v389 = vpop.permute.xlu0 %388
    %391 = vrot.lane.b32.xlu0 %v357, 48
    %v392 = vpop.permute.xlu0 %391
    %394 = vrot.lane.b32.xlu0 %v357, 52
    %v395 = vpop.permute.xlu0 %394
    %397 = vrot.lane.b32.xlu0 %v357, 56
    %v398 = vpop.permute.xlu0 %397
    %400 = vrot.lane.b32.xlu0 %v357, 60
    %v401 = vpop.permute.xlu0 %400
    %v403 = vsel %vm156, %v279, %v359
    %v404 = vsel %vm158, %v403, %v362
    %v405 = vsel %vm160, %v404, %v365
    %v406 = vsel %vm162, %v405, %v368
    %v407 = vsel %vm164, %v406, %v371
    %v408 = vsel %vm166, %v407, %v374
    %v409 = vsel %vm168, %v408, %v377
    %v410 = vsel %vm170, %v409, %v380
    %v411 = vsel %vm172, %v410, %v383
    %v412 = vsel %vm174, %v411, %v386
    %v413 = vsel %vm176, %v412, %v389
    %v414 = vsel %vm178, %v413, %v392
    %v415 = vsel %vm180, %v414, %v395
    %v416 = vsel %vm182, %v415, %v398
    %v417 = vsel %vm184, %v416, %v401
    %v418 = vlaneseq
    %v419 = vshrl.u32 %v418, 7
    %v420 = vsub.s32 0, %v419
    %v421 = vrot.slane %v417, %v420
    %v422 = vadd.f32 %v349, %v421
    %v423 = vadd.f32 %v350, %v421
    %v424 = vadd.f32 %v351, %v421
    %v425 = vadd.f32 %v352, %v421
    %vm426 = vcmask 581632
    %427 = vst.msk [vmem:[#allocation2] sm:$0x1] %vm426, 0.0
    %428 = vst.msk [vmem:[#allocation2 + $0x18] sm:$0x1] %vm426, 0.0
    %429 = vst.msk [vmem:[#allocation2 + $0x11] sm:$0x1] %vm426, 0.0
    %430 = vst.msk [vmem:[#allocation2 + $0x29] sm:$0x1] %vm426, 0.0
    %431 = vst.msk [vmem:[#allocation2] sm:$0xff] %vm156, 0.0
    %432 = vst.msk [vmem:[#allocation2 + $0x8] sm:$0xff] %vm156, 0.0
    %vm433 = vcmask 25600
    %434 = vst.msk [vmem:[#allocation2 + $0x10] sm:$0x3] %vm433, 0.0
    %435 = vst.msk [vmem:[#allocation2 + $0x18] sm:$0xff] %vm156, 0.0
    %436 = vst.msk [vmem:[#allocation2 + $0x20] sm:$0xff] %vm156, 0.0
    %437 = vst.msk [vmem:[#allocation2 + $0x28] sm:$0x3] %vm433, 0.0
    %vm438 = vcmask 589344
    %439 = vst.msk [vmem:[#allocation2] sm:$0xff] %vm438, 0.0
    %440 = vst.msk [vmem:[#allocation2 + $0x8] sm:$0xff] %vm438, 0.0
    %vm441 = vcmask 583200
    %442 = vst.msk [vmem:[#allocation2 + $0x10] sm:$0x3] %vm441, 0.0
    %443 = vst.msk [vmem:[#allocation2 + $0x18] sm:$0xff] %vm438, 0.0
    %444 = vst.msk [vmem:[#allocation2 + $0x20] sm:$0xff] %vm438, 0.0
    %445 = vst.msk [vmem:[#allocation2 + $0x28] sm:$0x3] %vm441, 0.0
    %450 = vrot.lane.b32.xlu0 %v422, 4
    %v451 = vpop.permute.xlu0 %450
    %452 = vrot.lane.b32.xlu0 %v423, 4
    %v453 = vpop.permute.xlu0 %452
    %454 = vrot.lane.b32.xlu0 %v424, 4
    %v455 = vpop.permute.xlu0 %454
    %456 = vrot.lane.b32.xlu0 %v425, 4
    %v457 = vpop.permute.xlu0 %456
    %vm462 = vcmask 556064
    %463 = vst.msk [vmem:[#allocation2 + $0x1] sm:$0xff] %vm462, %v451
    %464 = vst.msk [vmem:[#allocation2 + $0x9] sm:$0xff] %vm462, %v453
    %465 = vst.msk [vmem:[#allocation2 + $0x19] sm:$0xff] %vm462, %v455
    %466 = vst.msk [vmem:[#allocation2 + $0x21] sm:$0xff] %vm462, %v457
    %v467 = vld [vmem:[#allocation2] sm:$0xff]
    %v468 = vld [vmem:[#allocation2 + $0x8] sm:$0xff]
    %v469 = vld [vmem:[#allocation2 + $0x18] sm:$0xff]
    %v470 = vld [vmem:[#allocation2 + $0x20] sm:$0xff]
    %v471 = vld [vmem:[%s3] sm:$0xff]
    %v472 = vld [vmem:[%s3 + $0x8] sm:$0xff]
    %v473 = vld [vmem:[%s3 + $0x10] sm:$0xff]
    %v474 = vld [vmem:[%s3 + $0x18] sm:$0xff]
    %v475 = vld [vmem:[%s3 + $0x20] sm:$0xff]
    %v476 = vld [vmem:[%s3 + $0x28] sm:$0xff]
    %v477 = vld [vmem:[%s3 + $0x30] sm:$0xff]
    %v478 = vld [vmem:[%s3 + $0x38] sm:$0xff]
    %v479 = vld [vmem:[%s3 + $0x40] sm:$0xff]
    %v480 = vld [vmem:[#allocation2 + $0x1] sm:$0xff]
    %v481 = vld [vmem:[#allocation2 + $0x9] sm:$0xff]
    %v482 = vld [vmem:[#allocation2 + $0x19] sm:$0xff]
    %v483 = vld [vmem:[#allocation2 + $0x21] sm:$0xff]
    %s484 = scalar_lea.vmem %s3, 72
    %v485 = vld [vmem:[%s484] sm:$0xff]
    %v486 = vld [vmem:[%s484 + $0x8] sm:$0xff]
    %v487 = vld [vmem:[%s484 + $0x10] sm:$0xff]
    %v488 = vld [vmem:[%s484 + $0x18] sm:$0xff]
    %v489 = vld [vmem:[%s484 + $0x20] sm:$0xff]
    %v490 = vld [vmem:[%s484 + $0x28] sm:$0xff]
    %v491 = vld [vmem:[%s484 + $0x30] sm:$0xff]
    %v492 = vld [vmem:[%s484 + $0x38] sm:$0xff]
    %v493 = vld [vmem:[%s484 + $0x40] sm:$0xff]
    %vm494 = vcmask 588800
    %v496 = vsel %vm494, %v480, 0
    %v499 = vsel %vm494, %v481, 0
    %v502 = vsel %vm494, %v482, 0
    %v505 = vsel %vm494, %v483, 0
    %507 = vmatprep.subr.mxu0 0.0
    %508 = vmatpush1.msra.mxu0 0.0
    %509 = vmatprep.subr.mxu0 0.0
    %510 = vmatpush1.msra.mxu0 0.0
    %511 = vmatprep.subr.mxu0 0.0
    %512 = vmatpush1.msra.mxu0 0.0
    %513 = vmatprep.subr.mxu0 0.0
    %514 = vmatpush1.msra.mxu0 0.0
    %515 = vmatprep.subr.mxu0 0.0
    %516 = vmatpush1.msra.mxu0 0.0
    %517 = vmatprep.subr.mxu0 0.0
    %518 = vmatpush1.msra.mxu0 0.0
    %519 = vmatprep.subr.mxu0 0.0
    %520 = vmatpush1.msra.mxu0 0.0
    %521 = vmatprep.subr.mxu0 0.0
    %522 = vmatpush1.msra.mxu0 %v493
    %523 = vmatprep.subr.mxu0 0.0
    %524 = vmatpush1.msra.mxu0 %v492
    %525 = vmatprep.subr.mxu0 0.0
    %526 = vmatpush1.msra.mxu0 %v491
    %527 = vmatprep.subr.mxu0 0.0
    %528 = vmatpush1.msra.mxu0 %v490
    %529 = vmatprep.subr.mxu0 0.0
    %530 = vmatpush1.msra.mxu0 %v489
    %531 = vmatprep.subr.mxu0 0.0
    %532 = vmatpush1.msra.mxu0 %v488
    %533 = vmatprep.subr.mxu0 0.0
    %534 = vmatpush1.msra.mxu0 %v487
    %535 = vmatprep.subr.mxu0 0.0
    %536 = vmatpush1.msra.mxu0 %v486
    %537 = vmatprep.subr.mxu0 0.0
    %538 = vmatpush1.msra.mxu0 %v485
    %539 = vmatprep.subr.mxu0 0.0
    %540 = vmatpush2.msra.mxu0 0.0
    %541 = vmatprep.subr.mxu0 0.0
    %542 = vmatpush2.msra.mxu0 0.0
    %543 = vmatprep.subr.mxu0 0.0
    %544 = vmatpush2.msra.mxu0 0.0
    %545 = vmatprep.subr.mxu0 0.0
    %546 = vmatpush2.msra.mxu0 0.0
    %547 = vmatprep.subr.mxu0 0.0
    %548 = vmatpush2.msra.mxu0 0.0
    %549 = vmatprep.subr.mxu0 0.0
    %550 = vmatpush2.msra.mxu0 0.0
    %551 = vmatprep.subr.mxu0 0.0
    %552 = vmatpush2.msra.mxu0 0.0
    %553 = vmatprep.subr.mxu0 0.0
    %554 = vmatpush2.msra.mxu0 0.0
    %555 = vmatprep.subr.mxu0 0.0
    %556 = vmatpush2.msra.mxu0 0.0
    %557 = vmatprep.subr.mxu0 0.0
    %558 = vmatpush2.msra.mxu0 0.0
    %559 = vmatprep.subr.mxu0 0.0
    %560 = vmatpush2.msra.mxu0 0.0
    %561 = vmatprep.subr.mxu0 0.0
    %562 = vmatpush2.msra.mxu0 0.0
    %563 = vmatprep.subr.mxu0 0.0
    %564 = vmatpush2.msra.mxu0 0.0
    %565 = vmatprep.subr.mxu0 0.0
    %566 = vmatpush2.msra.mxu0 0.0
    %567 = vmatprep.subr.mxu0 0.0
    %568 = vmatpush2.msra.mxu0 0.0
    %569 = vmatprep.subr.mxu0 0.0
    %570 = vmatpush2.msra.mxu0 0.0
    %571 = vmatprep.mubr.f32.mxu0 0.0
    %572 = vmatmul.mubr.f32.gmra.mxu0 %v496
    %v573 = vpop.f32.mrf.mxu0
    %v574 = vadd.f32 0.0, %v573
    %v575 = vpop.f32.mrf.mxu0
    %576 = vmatprep.mubr.f32.mxu0 0.0
    %577 = vmatmul.mubr.f32.gmra.mxu0 %v499
    %v578 = vpop.f32.mrf.mxu0
    %v579 = vadd.f32 0.0, %v578
    %v580 = vpop.f32.mrf.mxu0
    %581 = vmatprep.mubr.f32.mxu0 0.0
    %582 = vmatmul.mubr.f32.gmra.mxu0 %v502
    %v583 = vpop.f32.mrf.mxu0
    %v584 = vadd.f32 0.0, %v583
    %v585 = vpop.f32.mrf.mxu0
    %586 = vmatprep.mubr.f32.mxu0 0.0
    %587 = vmatmul.mubr.f32.gmra.mxu0 %v505
    %v588 = vpop.f32.mrf.mxu0
    %v589 = vadd.f32 0.0, %v588
    %v590 = vpop.f32.mrf.mxu0
    %591 = vdwg.mxu0
    %v593 = vsel %vm494, %v467, 0
    %v596 = vsel %vm494, %v468, 0
    %v599 = vsel %vm494, %v469, 0
    %v602 = vsel %vm494, %v470, 0
    %604 = vmatprep.subr.mxu0 0.0
    %605 = vmatpush1.msra.mxu0 0.0
    %606 = vmatprep.subr.mxu0 0.0
    %607 = vmatpush1.msra.mxu0 0.0
    %608 = vmatprep.subr.mxu0 0.0
    %609 = vmatpush1.msra.mxu0 0.0
    %610 = vmatprep.subr.mxu0 0.0
    %611 = vmatpush1.msra.mxu0 0.0
    %612 = vmatprep.subr.mxu0 0.0
    %613 = vmatpush1.msra.mxu0 0.0
    %614 = vmatprep.subr.mxu0 0.0
    %615 = vmatpush1.msra.mxu0 0.0
    %616 = vmatprep.subr.mxu0 0.0
    %617 = vmatpush1.msra.mxu0 0.0
    %618 = vmatprep.subr.mxu0 0.0
    %619 = vmatpush1.msra.mxu0 %v479
    %620 = vmatprep.subr.mxu0 0.0
    %621 = vmatpush1.msra.mxu0 %v478
    %622 = vmatprep.subr.mxu0 0.0
    %623 = vmatpush1.msra.mxu0 %v477
    %624 = vmatprep.subr.mxu0 0.0
    %625 = vmatpush1.msra.mxu0 %v476
    %626 = vmatprep.subr.mxu0 0.0
    %627 = vmatpush1.msra.mxu0 %v475
    %628 = vmatprep.subr.mxu0 0.0
    %629 = vmatpush1.msra.mxu0 %v474
    %630 = vmatprep.subr.mxu0 0.0
    %631 = vmatpush1.msra.mxu0 %v473
    %632 = vmatprep.subr.mxu0 0.0
    %633 = vmatpush1.msra.mxu0 %v472
    %634 = vmatprep.subr.mxu0 0.0
    %635 = vmatpush1.msra.mxu0 %v471
    %636 = vmatprep.subr.mxu0 0.0
    %637 = vmatpush2.msra.mxu0 0.0
    %638 = vmatprep.subr.mxu0 0.0
    %639 = vmatpush2.msra.mxu0 0.0
    %640 = vmatprep.subr.mxu0 0.0
    %641 = vmatpush2.msra.mxu0 0.0
    %642 = vmatprep.subr.mxu0 0.0
    %643 = vmatpush2.msra.mxu0 0.0
    %644 = vmatprep.subr.mxu0 0.0
    %645 = vmatpush2.msra.mxu0 0.0
    %646 = vmatprep.subr.mxu0 0.0
    %647 = vmatpush2.msra.mxu0 0.0
    %648 = vmatprep.subr.mxu0 0.0
    %649 = vmatpush2.msra.mxu0 0.0
    %650 = vmatprep.subr.mxu0 0.0
    %651 = vmatpush2.msra.mxu0 0.0
    %652 = vmatprep.subr.mxu0 0.0
    %653 = vmatpush2.msra.mxu0 0.0
    %654 = vmatprep.subr.mxu0 0.0
    %655 = vmatpush2.msra.mxu0 0.0
    %656 = vmatprep.subr.mxu0 0.0
    %657 = vmatpush2.msra.mxu0 0.0
    %658 = vmatprep.subr.mxu0 0.0
    %659 = vmatpush2.msra.mxu0 0.0
    %660 = vmatprep.subr.mxu0 0.0
    %661 = vmatpush2.msra.mxu0 0.0
    %662 = vmatprep.subr.mxu0 0.0
    %663 = vmatpush2.msra.mxu0 0.0
    %664 = vmatprep.subr.mxu0 0.0
    %665 = vmatpush2.msra.mxu0 0.0
    %666 = vmatprep.subr.mxu0 0.0
    %667 = vmatpush2.msra.mxu0 0.0
    %668 = vmatprep.mubr.f32.mxu0 0.0
    %669 = vmatmul.mubr.f32.gmra.mxu0 %v593
    %v670 = vpop.f32.mrf.mxu0
    %v671 = vadd.f32 %v574, %v670
    %v672 = vpop.f32.mrf.mxu0
    %673 = vmatprep.mubr.f32.mxu0 0.0
    %674 = vmatmul.mubr.f32.gmra.mxu0 %v596
    %v675 = vpop.f32.mrf.mxu0
    %v676 = vadd.f32 %v579, %v675
    %v677 = vpop.f32.mrf.mxu0
    %678 = vmatprep.mubr.f32.mxu0 0.0
    %679 = vmatmul.mubr.f32.gmra.mxu0 %v599
    %v680 = vpop.f32.mrf.mxu0
    %v681 = vadd.f32 %v584, %v680
    %v682 = vpop.f32.mrf.mxu0
    %683 = vmatprep.mubr.f32.mxu0 0.0
    %684 = vmatmul.mubr.f32.gmra.mxu0 %v602
    %v685 = vpop.f32.mrf.mxu0
    %v686 = vadd.f32 %v589, %v685
    %v687 = vpop.f32.mrf.mxu0
    %688 = vdwg.mxu0
    %v689 = vld [vmem:[#allocation2 + $0x2] sm:$0xff]
    %v690 = vld [vmem:[#allocation2 + $0xa] sm:$0xff]
    %v691 = vld [vmem:[#allocation2 + $0x1a] sm:$0xff]
    %v692 = vld [vmem:[#allocation2 + $0x22] sm:$0xff]
    %s693 = scalar_lea.vmem %s3, 144
    %v694 = vld [vmem:[%s693] sm:$0xff]
    %v695 = vld [vmem:[%s693 + $0x8] sm:$0xff]
    %v696 = vld [vmem:[%s693 + $0x10] sm:$0xff]
    %v697 = vld [vmem:[%s693 + $0x18] sm:$0xff]
    %v698 = vld [vmem:[%s693 + $0x20] sm:$0xff]
    %v699 = vld [vmem:[%s693 + $0x28] sm:$0xff]
    %v700 = vld [vmem:[%s693 + $0x30] sm:$0xff]
    %v701 = vld [vmem:[%s693 + $0x38] sm:$0xff]
    %v702 = vld [vmem:[%s693 + $0x40] sm:$0xff]
    %v704 = vsel %vm494, %v689, 0
    %v707 = vsel %vm494, %v690, 0
    %v710 = vsel %vm494, %v691, 0
    %v713 = vsel %vm494, %v692, 0
    %715 = vmatprep.subr.mxu0 0.0
    %716 = vmatpush1.msra.mxu0 0.0
    %717 = vmatprep.subr.mxu0 0.0
    %718 = vmatpush1.msra.mxu0 0.0
    %719 = vmatprep.subr.mxu0 0.0
    %720 = vmatpush1.msra.mxu0 0.0
    %721 = vmatprep.subr.mxu0 0.0
    %722 = vmatpush1.msra.mxu0 0.0
    %723 = vmatprep.subr.mxu0 0.0
    %724 = vmatpush1.msra.mxu0 0.0
    %725 = vmatprep.subr.mxu0 0.0
    %726 = vmatpush1.msra.mxu0 0.0
    %727 = vmatprep.subr.mxu0 0.0
    %728 = vmatpush1.msra.mxu0 0.0
    %729 = vmatprep.subr.mxu0 0.0
    %730 = vmatpush1.msra.mxu0 %v702
    %731 = vmatprep.subr.mxu0 0.0
    %732 = vmatpush1.msra.mxu0 %v701
    %733 = vmatprep.subr.mxu0 0.0
    %734 = vmatpush1.msra.mxu0 %v700
    %735 = vmatprep.subr.mxu0 0.0
    %736 = vmatpush1.msra.mxu0 %v699
    %737 = vmatprep.subr.mxu0 0.0
    %738 = vmatpush1.msra.mxu0 %v698
    %739 = vmatprep.subr.mxu0 0.0
    %740 = vmatpush1.msra.mxu0 %v697
    %741 = vmatprep.subr.mxu0 0.0
    %742 = vmatpush1.msra.mxu0 %v696
    %743 = vmatprep.subr.mxu0 0.0
    %744 = vmatpush1.msra.mxu0 %v695
    %745 = vmatprep.subr.mxu0 0.0
    %746 = vmatpush1.msra.mxu0 %v694
    %747 = vmatprep.subr.mxu0 0.0
    %748 = vmatpush2.msra.mxu0 0.0
    %749 = vmatprep.subr.mxu0 0.0
    %750 = vmatpush2.msra.mxu0 0.0
    %751 = vmatprep.subr.mxu0 0.0
    %752 = vmatpush2.msra.mxu0 0.0
    %753 = vmatprep.subr.mxu0 0.0
    %754 = vmatpush2.msra.mxu0 0.0
    %755 = vmatprep.subr.mxu0 0.0
    %756 = vmatpush2.msra.mxu0 0.0
    %757 = vmatprep.subr.mxu0 0.0
    %758 = vmatpush2.msra.mxu0 0.0
    %759 = vmatprep.subr.mxu0 0.0
    %760 = vmatpush2.msra.mxu0 0.0
    %761 = vmatprep.subr.mxu0 0.0
    %762 = vmatpush2.msra.mxu0 0.0
    %763 = vmatprep.subr.mxu0 0.0
    %764 = vmatpush2.msra.mxu0 0.0
    %765 = vmatprep.subr.mxu0 0.0
    %766 = vmatpush2.msra.mxu0 0.0
    %767 = vmatprep.subr.mxu0 0.0
    %768 = vmatpush2.msra.mxu0 0.0
    %769 = vmatprep.subr.mxu0 0.0
    %770 = vmatpush2.msra.mxu0 0.0
    %771 = vmatprep.subr.mxu0 0.0
    %772 = vmatpush2.msra.mxu0 0.0
    %773 = vmatprep.subr.mxu0 0.0
    %774 = vmatpush2.msra.mxu0 0.0
    %775 = vmatprep.subr.mxu0 0.0
    %776 = vmatpush2.msra.mxu0 0.0
    %777 = vmatprep.subr.mxu0 0.0
    %778 = vmatpush2.msra.mxu0 0.0
    %779 = vmatprep.mubr.f32.mxu0 0.0
    %780 = vmatmul.mubr.f32.gmra.mxu0 %v704
    %v781 = vpop.f32.mrf.mxu0
    %v782 = vadd.f32 0.0, %v781
    %v783 = vpop.f32.mrf.mxu0
    %784 = vmatprep.mubr.f32.mxu0 0.0
    %785 = vmatmul.mubr.f32.gmra.mxu0 %v707
    %v786 = vpop.f32.mrf.mxu0
    %v787 = vadd.f32 0.0, %v786
    %v788 = vpop.f32.mrf.mxu0
    %789 = vmatprep.mubr.f32.mxu0 0.0
    %790 = vmatmul.mubr.f32.gmra.mxu0 %v710
    %v791 = vpop.f32.mrf.mxu0
    %v792 = vadd.f32 0.0, %v791
    %v793 = vpop.f32.mrf.mxu0
    %794 = vmatprep.mubr.f32.mxu0 0.0
    %795 = vmatmul.mubr.f32.gmra.mxu0 %v713
    %v796 = vpop.f32.mrf.mxu0
    %v797 = vadd.f32 0.0, %v796
    %v798 = vpop.f32.mrf.mxu0
    %799 = vdwg.mxu0
    %v800 = vadd.f32 %v671, %v782
    %v801 = vadd.f32 %v676, %v787
    %v802 = vadd.f32 %v681, %v792
    %v803 = vadd.f32 %v686, %v797
    %v804 = vld [vmem:[%s4] sm:$0x1]
    %v806 = vlaneseq
    %v807 = vshrl.u32 %v806, 7
    %v808 = vsub.s32 0, %v807
    %v809 = vrot.slane %v804, %v808
    %v811 = vadd.f32 %v800, %v809
    %v812 = vadd.f32 %v801, %v809
    %v813 = vadd.f32 %v802, %v809
    %v814 = vadd.f32 %v803, %v809
    %vm815 = vcmp.gt.f32.partialorder %v811, 0.0
    %vm816 = vcmp.gt.f32.partialorder %v812, 0.0
    %vm817 = vcmp.gt.f32.partialorder %v813, 0.0
    %vm818 = vcmp.gt.f32.partialorder %v814, 0.0
    %v819 = vld [vmem:[%s5] sm:$0x1]
    %v821 = vlaneseq
    %v822 = vshrl.u32 %v821, 7
    %v823 = vsub.s32 0, %v822
    %v824 = vrot.slane %v819, %v823
    %v826 = vmul.f32 %v811, %v824
    %v827 = vmul.f32 %v812, %v824
    %v828 = vmul.f32 %v813, %v824
    %v829 = vmul.f32 %v814, %v824
    %v830 = vsel %vm815, %v811, %v826
    %v831 = vsel %vm816, %v812, %v827
    %v832 = vsel %vm817, %v813, %v828
    %v833 = vsel %vm818, %v814, %v829
    %838 = vrot.lane.b32.xlu0 %v830, 4
    %v839 = vpop.permute.xlu0 %838
    %840 = vrot.lane.b32.xlu0 %v831, 4
    %v841 = vpop.permute.xlu0 %840
    %842 = vrot.lane.b32.xlu0 %v832, 4
    %v843 = vpop.permute.xlu0 %842
    %844 = vrot.lane.b32.xlu0 %v833, 4
    %v845 = vpop.permute.xlu0 %844
    %850 = vst.msk [vmem:[#allocation2 + $0x1] sm:$0xff] %vm462, %v839
    %851 = vst.msk [vmem:[#allocation2 + $0x9] sm:$0xff] %vm462, %v841
    %852 = vst.msk [vmem:[#allocation2 + $0x19] sm:$0xff] %vm462, %v843
    %853 = vst.msk [vmem:[#allocation2 + $0x21] sm:$0xff] %vm462, %v845
    %v854 = vld [vmem:[#allocation2] sm:$0xff]
    %v855 = vld [vmem:[#allocation2 + $0x8] sm:$0xff]
    %v856 = vld [vmem:[#allocation2 + $0x18] sm:$0xff]
    %v857 = vld [vmem:[#allocation2 + $0x20] sm:$0xff]
    %v858 = vld [vmem:[%s6] sm:$0xff]
    %v859 = vld [vmem:[%s6 + $0x8] sm:$0xff]
    %v860 = vld [vmem:[%s6 + $0x10] sm:$0xff]
    %v861 = vld [vmem:[%s6 + $0x18] sm:$0xff]
    %v862 = vld [vmem:[%s6 + $0x20] sm:$0xff]
    %v863 = vld [vmem:[%s6 + $0x28] sm:$0xff]
    %v864 = vld [vmem:[%s6 + $0x30] sm:$0xff]
    %v865 = vld [vmem:[%s6 + $0x38] sm:$0xff]
    %v866 = vld [vmem:[%s6 + $0x40] sm:$0xff]
    %v867 = vld [vmem:[#allocation2 + $0x1] sm:$0xff]
    %v868 = vld [vmem:[#allocation2 + $0x9] sm:$0xff]
    %v869 = vld [vmem:[#allocation2 + $0x19] sm:$0xff]
    %v870 = vld [vmem:[#allocation2 + $0x21] sm:$0xff]
    %s871 = scalar_lea.vmem %s6, 72
    %v872 = vld [vmem:[%s871] sm:$0xff]
    %v873 = vld [vmem:[%s871 + $0x8] sm:$0xff]
    %v874 = vld [vmem:[%s871 + $0x10] sm:$0xff]
    %v875 = vld [vmem:[%s871 + $0x18] sm:$0xff]
    %v876 = vld [vmem:[%s871 + $0x20] sm:$0xff]
    %v877 = vld [vmem:[%s871 + $0x28] sm:$0xff]
    %v878 = vld [vmem:[%s871 + $0x30] sm:$0xff]
    %v879 = vld [vmem:[%s871 + $0x38] sm:$0xff]
    %v880 = vld [vmem:[%s871 + $0x40] sm:$0xff]
    %v882 = vsel %vm494, %v867, 0
    %v885 = vsel %vm494, %v868, 0
    %v888 = vsel %vm494, %v869, 0
    %v891 = vsel %vm494, %v870, 0
    %893 = vmatprep.subr.mxu0 0.0
    %894 = vmatpush1.msra.mxu0 0.0
    %895 = vmatprep.subr.mxu0 0.0
    %896 = vmatpush1.msra.mxu0 0.0
    %897 = vmatprep.subr.mxu0 0.0
    %898 = vmatpush1.msra.mxu0 0.0
    %899 = vmatprep.subr.mxu0 0.0
    %900 = vmatpush1.msra.mxu0 0.0
    %901 = vmatprep.subr.mxu0 0.0
    %902 = vmatpush1.msra.mxu0 0.0
    %903 = vmatprep.subr.mxu0 0.0
    %904 = vmatpush1.msra.mxu0 0.0
    %905 = vmatprep.subr.mxu0 0.0
    %906 = vmatpush1.msra.mxu0 0.0
    %907 = vmatprep.subr.mxu0 0.0
    %908 = vmatpush1.msra.mxu0 %v880
    %909 = vmatprep.subr.mxu0 0.0
    %910 = vmatpush1.msra.mxu0 %v879
    %911 = vmatprep.subr.mxu0 0.0
    %912 = vmatpush1.msra.mxu0 %v878
    %913 = vmatprep.subr.mxu0 0.0
    %914 = vmatpush1.msra.mxu0 %v877
    %915 = vmatprep.subr.mxu0 0.0
    %916 = vmatpush1.msra.mxu0 %v876
    %917 = vmatprep.subr.mxu0 0.0
    %918 = vmatpush1.msra.mxu0 %v875
    %919 = vmatprep.subr.mxu0 0.0
    %920 = vmatpush1.msra.mxu0 %v874
    %921 = vmatprep.subr.mxu0 0.0
    %922 = vmatpush1.msra.mxu0 %v873
    %923 = vmatprep.subr.mxu0 0.0
    %924 = vmatpush1.msra.mxu0 %v872
    %925 = vmatprep.subr.mxu0 0.0
    %926 = vmatpush2.msra.mxu0 0.0
    %927 = vmatprep.subr.mxu0 0.0
    %928 = vmatpush2.msra.mxu0 0.0
    %929 = vmatprep.subr.mxu0 0.0
    %930 = vmatpush2.msra.mxu0 0.0
    %931 = vmatprep.subr.mxu0 0.0
    %932 = vmatpush2.msra.mxu0 0.0
    %933 = vmatprep.subr.mxu0 0.0
    %934 = vmatpush2.msra.mxu0 0.0
    %935 = vmatprep.subr.mxu0 0.0
    %936 = vmatpush2.msra.mxu0 0.0
    %937 = vmatprep.subr.mxu0 0.0
    %938 = vmatpush2.msra.mxu0 0.0
    %939 = vmatprep.subr.mxu0 0.0
    %940 = vmatpush2.msra.mxu0 0.0
    %941 = vmatprep.subr.mxu0 0.0
    %942 = vmatpush2.msra.mxu0 0.0
    %943 = vmatprep.subr.mxu0 0.0
    %944 = vmatpush2.msra.mxu0 0.0
    %945 = vmatprep.subr.mxu0 0.0
    %946 = vmatpush2.msra.mxu0 0.0
    %947 = vmatprep.subr.mxu0 0.0
    %948 = vmatpush2.msra.mxu0 0.0
    %949 = vmatprep.subr.mxu0 0.0
    %950 = vmatpush2.msra.mxu0 0.0
    %951 = vmatprep.subr.mxu0 0.0
    %952 = vmatpush2.msra.mxu0 0.0
    %953 = vmatprep.subr.mxu0 0.0
    %954 = vmatpush2.msra.mxu0 0.0
    %955 = vmatprep.subr.mxu0 0.0
    %956 = vmatpush2.msra.mxu0 0.0
    %957 = vmatprep.mubr.f32.mxu0 0.0
    %958 = vmatmul.mubr.f32.gmra.mxu0 %v882
    %v959 = vpop.f32.mrf.mxu0
    %v960 = vadd.f32 0.0, %v959
    %v961 = vpop.f32.mrf.mxu0
    %962 = vmatprep.mubr.f32.mxu0 0.0
    %963 = vmatmul.mubr.f32.gmra.mxu0 %v885
    %v964 = vpop.f32.mrf.mxu0
    %v965 = vadd.f32 0.0, %v964
    %v966 = vpop.f32.mrf.mxu0
    %967 = vmatprep.mubr.f32.mxu0 0.0
    %968 = vmatmul.mubr.f32.gmra.mxu0 %v888
    %v969 = vpop.f32.mrf.mxu0
    %v970 = vadd.f32 0.0, %v969
    %v971 = vpop.f32.mrf.mxu0
    %972 = vmatprep.mubr.f32.mxu0 0.0
    %973 = vmatmul.mubr.f32.gmra.mxu0 %v891
    %v974 = vpop.f32.mrf.mxu0
    %v975 = vadd.f32 0.0, %v974
    %v976 = vpop.f32.mrf.mxu0
    %977 = vdwg.mxu0
    %v979 = vsel %vm494, %v854, 0
    %v982 = vsel %vm494, %v855, 0
    %v985 = vsel %vm494, %v856, 0
    %v988 = vsel %vm494, %v857, 0
    %990 = vmatprep.subr.mxu0 0.0
    %991 = vmatpush1.msra.mxu0 0.0
    %992 = vmatprep.subr.mxu0 0.0
    %993 = vmatpush1.msra.mxu0 0.0
    %994 = vmatprep.subr.mxu0 0.0
    %995 = vmatpush1.msra.mxu0 0.0
    %996 = vmatprep.subr.mxu0 0.0
    %997 = vmatpush1.msra.mxu0 0.0
    %998 = vmatprep.subr.mxu0 0.0
    %999 = vmatpush1.msra.mxu0 0.0
    %1000 = vmatprep.subr.mxu0 0.0
    %1001 = vmatpush1.msra.mxu0 0.0
    %1002 = vmatprep.subr.mxu0 0.0
    %1003 = vmatpush1.msra.mxu0 0.0
    %1004 = vmatprep.subr.mxu0 0.0
    %1005 = vmatpush1.msra.mxu0 %v866
    %1006 = vmatprep.subr.mxu0 0.0
    %1007 = vmatpush1.msra.mxu0 %v865
    %1008 = vmatprep.subr.mxu0 0.0
    %1009 = vmatpush1.msra.mxu0 %v864
    %1010 = vmatprep.subr.mxu0 0.0
    %1011 = vmatpush1.msra.mxu0 %v863
    %1012 = vmatprep.subr.mxu0 0.0
    %1013 = vmatpush1.msra.mxu0 %v862
    %1014 = vmatprep.subr.mxu0 0.0
    %1015 = vmatpush1.msra.mxu0 %v861
    %1016 = vmatprep.subr.mxu0 0.0
    %1017 = vmatpush1.msra.mxu0 %v860
    %1018 = vmatprep.subr.mxu0 0.0
    %1019 = vmatpush1.msra.mxu0 %v859
    %1020 = vmatprep.subr.mxu0 0.0
    %1021 = vmatpush1.msra.mxu0 %v858
    %1022 = vmatprep.subr.mxu0 0.0
    %1023 = vmatpush2.msra.mxu0 0.0
    %1024 = vmatprep.subr.mxu0 0.0
    %1025 = vmatpush2.msra.mxu0 0.0
    %1026 = vmatprep.subr.mxu0 0.0
    %1027 = vmatpush2.msra.mxu0 0.0
    %1028 = vmatprep.subr.mxu0 0.0
    %1029 = vmatpush2.msra.mxu0 0.0
    %1030 = vmatprep.subr.mxu0 0.0
    %1031 = vmatpush2.msra.mxu0 0.0
    %1032 = vmatprep.subr.mxu0 0.0
    %1033 = vmatpush2.msra.mxu0 0.0
    %1034 = vmatprep.subr.mxu0 0.0
    %1035 = vmatpush2.msra.mxu0 0.0
    %1036 = vmatprep.subr.mxu0 0.0
    %1037 = vmatpush2.msra.mxu0 0.0
    %1038 = vmatprep.subr.mxu0 0.0
    %1039 = vmatpush2.msra.mxu0 0.0
    %1040 = vmatprep.subr.mxu0 0.0
    %1041 = vmatpush2.msra.mxu0 0.0
    %1042 = vmatprep.subr.mxu0 0.0
    %1043 = vmatpush2.msra.mxu0 0.0
    %1044 = vmatprep.subr.mxu0 0.0
    %1045 = vmatpush2.msra.mxu0 0.0
    %1046 = vmatprep.subr.mxu0 0.0
    %1047 = vmatpush2.msra.mxu0 0.0
    %1048 = vmatprep.subr.mxu0 0.0
    %1049 = vmatpush2.msra.mxu0 0.0
    %1050 = vmatprep.subr.mxu0 0.0
    %1051 = vmatpush2.msra.mxu0 0.0
    %1052 = vmatprep.subr.mxu0 0.0
    %1053 = vmatpush2.msra.mxu0 0.0
    %1054 = vmatprep.mubr.f32.mxu0 0.0
    %1055 = vmatmul.mubr.f32.gmra.mxu0 %v979
    %v1056 = vpop.f32.mrf.mxu0
    %v1057 = vadd.f32 %v960, %v1056
    %v1058 = vpop.f32.mrf.mxu0
    %1059 = vmatprep.mubr.f32.mxu0 0.0
    %1060 = vmatmul.mubr.f32.gmra.mxu0 %v982
    %v1061 = vpop.f32.mrf.mxu0
    %v1062 = vadd.f32 %v965, %v1061
    %v1063 = vpop.f32.mrf.mxu0
    %1064 = vmatprep.mubr.f32.mxu0 0.0
    %1065 = vmatmul.mubr.f32.gmra.mxu0 %v985
    %v1066 = vpop.f32.mrf.mxu0
    %v1067 = vadd.f32 %v970, %v1066
    %v1068 = vpop.f32.mrf.mxu0
    %1069 = vmatprep.mubr.f32.mxu0 0.0
    %1070 = vmatmul.mubr.f32.gmra.mxu0 %v988
    %v1071 = vpop.f32.mrf.mxu0
    %v1072 = vadd.f32 %v975, %v1071
    %v1073 = vpop.f32.mrf.mxu0
    %1074 = vdwg.mxu0
    %v1075 = vld [vmem:[#allocation2 + $0x2] sm:$0xff]
    %v1076 = vld [vmem:[#allocation2 + $0xa] sm:$0xff]
    %v1077 = vld [vmem:[#allocation2 + $0x1a] sm:$0xff]
    %v1078 = vld [vmem:[#allocation2 + $0x22] sm:$0xff]
    %s1079 = scalar_lea.vmem %s6, 144
    %v1080 = vld [vmem:[%s1079] sm:$0xff]
    %v1081 = vld [vmem:[%s1079 + $0x8] sm:$0xff]
    %v1082 = vld [vmem:[%s1079 + $0x10] sm:$0xff]
    %v1083 = vld [vmem:[%s1079 + $0x18] sm:$0xff]
    %v1084 = vld [vmem:[%s1079 + $0x20] sm:$0xff]
    %v1085 = vld [vmem:[%s1079 + $0x28] sm:$0xff]
    %v1086 = vld [vmem:[%s1079 + $0x30] sm:$0xff]
    %v1087 = vld [vmem:[%s1079 + $0x38] sm:$0xff]
    %v1088 = vld [vmem:[%s1079 + $0x40] sm:$0xff]
    %v1090 = vsel %vm494, %v1075, 0
    %v1093 = vsel %vm494, %v1076, 0
    %v1096 = vsel %vm494, %v1077, 0
    %v1099 = vsel %vm494, %v1078, 0
    %1101 = vmatprep.subr.mxu0 0.0
    %1102 = vmatpush1.msra.mxu0 0.0
    %1103 = vmatprep.subr.mxu0 0.0
    %1104 = vmatpush1.msra.mxu0 0.0
    %1105 = vmatprep.subr.mxu0 0.0
    %1106 = vmatpush1.msra.mxu0 0.0
    %1107 = vmatprep.subr.mxu0 0.0
    %1108 = vmatpush1.msra.mxu0 0.0
    %1109 = vmatprep.subr.mxu0 0.0
    %1110 = vmatpush1.msra.mxu0 0.0
    %1111 = vmatprep.subr.mxu0 0.0
    %1112 = vmatpush1.msra.mxu0 0.0
    %1113 = vmatprep.subr.mxu0 0.0
    %1114 = vmatpush1.msra.mxu0 0.0
    %1115 = vmatprep.subr.mxu0 0.0
    %1116 = vmatpush1.msra.mxu0 %v1088
    %1117 = vmatprep.subr.mxu0 0.0
    %1118 = vmatpush1.msra.mxu0 %v1087
    %1119 = vmatprep.subr.mxu0 0.0
    %1120 = vmatpush1.msra.mxu0 %v1086
    %1121 = vmatprep.subr.mxu0 0.0
    %1122 = vmatpush1.msra.mxu0 %v1085
    %1123 = vmatprep.subr.mxu0 0.0
    %1124 = vmatpush1.msra.mxu0 %v1084
    %1125 = vmatprep.subr.mxu0 0.0
    %1126 = vmatpush1.msra.mxu0 %v1083
    %1127 = vmatprep.subr.mxu0 0.0
    %1128 = vmatpush1.msra.mxu0 %v1082
    %1129 = vmatprep.subr.mxu0 0.0
    %1130 = vmatpush1.msra.mxu0 %v1081
    %1131 = vmatprep.subr.mxu0 0.0
    %1132 = vmatpush1.msra.mxu0 %v1080
    %1133 = vmatprep.subr.mxu0 0.0
    %1134 = vmatpush2.msra.mxu0 0.0
    %1135 = vmatprep.subr.mxu0 0.0
    %1136 = vmatpush2.msra.mxu0 0.0
    %1137 = vmatprep.subr.mxu0 0.0
    %1138 = vmatpush2.msra.mxu0 0.0
    %1139 = vmatprep.subr.mxu0 0.0
    %1140 = vmatpush2.msra.mxu0 0.0
    %1141 = vmatprep.subr.mxu0 0.0
    %1142 = vmatpush2.msra.mxu0 0.0
    %1143 = vmatprep.subr.mxu0 0.0
    %1144 = vmatpush2.msra.mxu0 0.0
    %1145 = vmatprep.subr.mxu0 0.0
    %1146 = vmatpush2.msra.mxu0 0.0
    %1147 = vmatprep.subr.mxu0 0.0
    %1148 = vmatpush2.msra.mxu0 0.0
    %1149 = vmatprep.subr.mxu0 0.0
    %1150 = vmatpush2.msra.mxu0 0.0
    %1151 = vmatprep.subr.mxu0 0.0
    %1152 = vmatpush2.msra.mxu0 0.0
    %1153 = vmatprep.subr.mxu0 0.0
    %1154 = vmatpush2.msra.mxu0 0.0
    %1155 = vmatprep.subr.mxu0 0.0
    %1156 = vmatpush2.msra.mxu0 0.0
    %1157 = vmatprep.subr.mxu0 0.0
    %1158 = vmatpush2.msra.mxu0 0.0
    %1159 = vmatprep.subr.mxu0 0.0
    %1160 = vmatpush2.msra.mxu0 0.0
    %1161 = vmatprep.subr.mxu0 0.0
    %1162 = vmatpush2.msra.mxu0 0.0
    %1163 = vmatprep.subr.mxu0 0.0
    %1164 = vmatpush2.msra.mxu0 0.0
    %1165 = vmatprep.mubr.f32.mxu0 0.0
    %1166 = vmatmul.mubr.f32.gmra.mxu0 %v1090
    %v1167 = vpop.f32.mrf.mxu0
    %v1168 = vadd.f32 0.0, %v1167
    %v1169 = vpop.f32.mrf.mxu0
    %1170 = vmatprep.mubr.f32.mxu0 0.0
    %1171 = vmatmul.mubr.f32.gmra.mxu0 %v1093
    %v1172 = vpop.f32.mrf.mxu0
    %v1173 = vadd.f32 0.0, %v1172
    %v1174 = vpop.f32.mrf.mxu0
    %1175 = vmatprep.mubr.f32.mxu0 0.0
    %1176 = vmatmul.mubr.f32.gmra.mxu0 %v1096
    %v1177 = vpop.f32.mrf.mxu0
    %v1178 = vadd.f32 0.0, %v1177
    %v1179 = vpop.f32.mrf.mxu0
    %1180 = vmatprep.mubr.f32.mxu0 0.0
    %1181 = vmatmul.mubr.f32.gmra.mxu0 %v1099
    %v1182 = vpop.f32.mrf.mxu0
    %v1183 = vadd.f32 0.0, %v1182
    %v1184 = vpop.f32.mrf.mxu0
    %1185 = vdwg.mxu0
    %v1186 = vadd.f32 %v1057, %v1168
    %v1187 = vadd.f32 %v1062, %v1173
    %v1188 = vadd.f32 %v1067, %v1178
    %v1189 = vadd.f32 %v1072, %v1183
    %v1190 = vld [vmem:[%s7] sm:$0x1]
    %v1192 = vlaneseq
    %v1193 = vshrl.u32 %v1192, 7
    %v1194 = vsub.s32 0, %v1193
    %v1195 = vrot.slane %v1190, %v1194
    %v1197 = vadd.f32 %v1186, %v1195
    %v1198 = vadd.f32 %v1187, %v1195
    %v1199 = vadd.f32 %v1188, %v1195
    %v1200 = vadd.f32 %v1189, %v1195
    %v1201 = vld [vmem:[%s0] sm:$0xff]
    %v1202 = vld [vmem:[%s0 + $0x8] sm:$0xff]
    %v1203 = vld [vmem:[%s0 + $0x10] sm:$0xff]
    %v1204 = vld [vmem:[%s0 + $0x18] sm:$0xff]
    %v1205 = vadd.f32 %v1197, %v1201
    %v1206 = vadd.f32 %v1198, %v1202
    %v1207 = vadd.f32 %v1199, %v1203
    %v1208 = vadd.f32 %v1200, %v1204
    %1209 = vst.msk [vmem:[#allocation3] sm:$0xff] %vm34, %v1205
    %1210 = vst.msk [vmem:[#allocation3 + $0x8] sm:$0xff] %vm34, %v1206
    %1211 = vst.msk [vmem:[#allocation3 + $0x10] sm:$0xff] %vm34, %v1207
    %1212 = vst.msk [vmem:[#allocation3 + $0x18] sm:$0xff] %vm34, %v1208
    // Predicated region
    $region34: #{tpu_custom_call.1} parent=1 // pred_check
      _
    $region35: #{tpu_custom_call.1} parent=1 // pred_check_branch
      %1214 = sbr.rel (0) target = $region37
    $region36: #{tpu_custom_call.1} parent=1 // pred_region
      %s1216 = ssub.s32 512, 512
      %1217 = vsyncadd [#allocation4], %s1216
      %s1218 = sshll.u32 [#allocation3], 4
      %s1219 = int_to_ptr.vmem [resolvable:$true] %s1218
      %1224 = dma.vmem_to_hbm [thread:$0]  %s1219, 512, %s8, [#allocation4], 128, 128, 8
    $region37: #{tpu_custom_call.1} parent=1 // pred_fallthru
      _
    // Predicated region
    $region38: #{tpu_custom_call.1} parent=1 // pred_check
      _
    $region39: #{tpu_custom_call.1} parent=1 // pred_check_branch
      %1226 = sbr.rel (0) target = $region41
    $region40: #{tpu_custom_call.1} parent=1 // pred_region
      %1227 = dma.done [#allocation4], 512
    $region41: #{tpu_custom_call.1} parent=1 // pred_fallthru
      _
    %1228 = vsyncpa [#allocation4], 1

</llo_original>
